<compile_context>
chip_gen: v6e
topology: v6e:2x2x1
jax: 0.10.0
libtpu: 0.0.40
codegen_flags: <defaults>
</compile_context>

<pallas_src>
import functools

import jax
import jax.numpy as jnp
import numpy as np
from jax import lax
from jax.experimental import pallas as pl
from jax.experimental.pallas import tpu as pltpu

EPS = 1e-5


def _resblock_kernel(x_ref, shf_ref, fold_ref, w1_ref, g1_ref, b1_ref,
                     w2_ref, g2_ref, b2_ref, o_ref, *, inv_count):
    """Everything lives in the fused lane-dense (N*H, W*C) layout."""
    x = x_ref[...].astype(jnp.float32)          # (NH, WC)
    fold = fold_ref[...]                        # (WC, WC) period-C summation
    s_up = shf_ref[0]                           # (NH, NH) h-1 shift (+ zero pad)
    s_dn = shf_ref[1]                           # (NH, NH) h+1 shift (+ zero pad)

    def bn_relu(y, gamma, beta):
        # Fused one-pass BatchNorm2d (training-mode batch stats) + ReLU.
        # y @ fold sums the W lane-groups that share a channel (result tiled
        # across all lanes); the sublane reduce sums over the N*H rows.
        s1 = jnp.sum(jnp.dot(y, fold, preferred_element_type=jnp.float32),
                     axis=0, keepdims=True) * inv_count          # mean (tiled)
        s2 = jnp.sum(jnp.dot(y * y, fold, preferred_element_type=jnp.float32),
                     axis=0, keepdims=True) * inv_count          # E[y^2] (tiled)
        var = s2 - s1 * s1                                       # biased var
        scale = gamma * lax.rsqrt(var + EPS)
        shift = beta - s1 * scale
        return jnp.maximum(y * scale + shift, 0.0)

    def conv3x3(y, wb_ref):
        # Same-padding 3x3 conv = sum over kernel rows kh of
        #   (row-shift_kh @ y) @ block-tridiagonal-weights_kh
        # Row shifts carry the per-image zero padding in H; the banded weight
        # matrices carry the zero padding in W.
        acc = jnp.dot(y, wb_ref[1], preferred_element_type=jnp.float32)      # kh=1
        y_up = jnp.dot(s_up, y, preferred_element_type=jnp.float32)          # kh=0
        acc = acc + jnp.dot(y_up, wb_ref[0], preferred_element_type=jnp.float32)
        y_dn = jnp.dot(s_dn, y, preferred_element_type=jnp.float32)          # kh=2
        acc = acc + jnp.dot(y_dn, wb_ref[2], preferred_element_type=jnp.float32)
        return acc

    h1 = bn_relu(x, g1_ref[...], b1_ref[...])
    c1 = conv3x3(h1, w1_ref)
    h2 = bn_relu(c1, g2_ref[...], b2_ref[...])
    c2 = conv3x3(h2, w2_ref)
    o_ref[...] = (c2 + x).astype(o_ref.dtype)   # residual add, lane-dense store


def _banded_conv_weights(w_oihw, W, C):
    """OIHW (C,C,3,3) -> (3, W*C, W*C) block-tridiagonal matmul weights."""
    taps = jnp.transpose(jnp.asarray(w_oihw, jnp.float32), (2, 3, 1, 0))  # (3,3,Ci,Co)
    bands = []
    for kh in range(3):
        m = jnp.zeros((W * C, W * C), jnp.float32)
        for kw in range(3):
            # input w = output w + (kw - 1); missing diagonals at the W edges
            # implement the zero padding.
            m = m + jnp.kron(jnp.eye(W, k=-(kw - 1), dtype=jnp.float32),
                             taps[kh, kw])
        bands.append(m)
    return jnp.stack(bands)                                               # (3,WC,WC)


def residual_block_pallas(x_nchw, w1_oihw, g1, b1, w2_oihw, g2, b2):
    """Forward pass of ResidualBlock. Inputs follow PyTorch conventions."""
    N, C, H, W = x_nchw.shape
    WC, NH = W * C, N * H

    # NCHW -> lane-dense (N*H, W*C). (If the surrounding model kept NHWC
    # activations these boundary transposes would disappear.)
    x2d = jnp.transpose(x_nchw, (0, 2, 3, 1)).reshape(NH, WC)

    wb1 = _banded_conv_weights(w1_oihw, W, C)
    wb2 = _banded_conv_weights(w2_oihw, W, C)

    # kh=0 / kh=2 row-shift matrices (block-diagonal per image; missing
    # diagonal entries implement the zero padding in H).
    shf = jnp.stack([
        jnp.kron(jnp.eye(N, dtype=jnp.float32), jnp.eye(H, k=-1, dtype=jnp.float32)),
        jnp.kron(jnp.eye(N, dtype=jnp.float32), jnp.eye(H, k=1, dtype=jnp.float32)),
    ])                                                                     # (2,NH,NH)

    # period-C fold matrix: fold[i, j] = 1 iff i % C == j % C.
    fold = jnp.kron(jnp.ones((W, W), jnp.float32), jnp.eye(C, dtype=jnp.float32))

    # BN affine params tiled onto the fused (W*C) lane axis.
    tile = lambda v: jnp.tile(jnp.asarray(v, jnp.float32).reshape(1, C), (1, W))

    kernel = functools.partial(_resblock_kernel,
                               inv_count=1.0 / float(N * H * W))
    vmem = pl.BlockSpec(memory_space=pltpu.MemorySpace.VMEM)
    out2d = pl.pallas_call(
        kernel,
        out_shape=jax.ShapeDtypeStruct((NH, WC), x_nchw.dtype),
        in_specs=[vmem] * 9,
        out_specs=vmem,
    )(x2d, shf, fold, wb1, tile(g1), tile(b1), wb2, tile(g2), tile(b2))

    # TODO(synk): for large N*H*W add an H-strip grid (parallel across v7x's
    # two TensorCores) with a two-pass / partial-sum BN-stats scheme; at this
    # size the whole problem fits in a handful of vregs and a grid only adds
    # per-step overhead.

    return jnp.transpose(out2d.reshape(N, H, W, C), (0, 3, 1, 2))   # -> NCHW


def residual_block_ref(x, w1, g1, b1, w2, g2, b2):
    """Pure-JAX reference (NCHW), mirrors the PyTorch module exactly."""
    def bn_relu(y, g, b):
        mean = jnp.mean(y, axis=(0, 2, 3), keepdims=True)
        var = jnp.mean((y - mean) ** 2, axis=(0, 2, 3), keepdims=True)
        yn = (y - mean) / jnp.sqrt(var + EPS)
        yn = yn * g.reshape(1, -1, 1, 1) + b.reshape(1, -1, 1, 1)
        return jnp.maximum(yn, 0.0)

    def conv(y, w):
        return lax.conv_general_dilated(
            y, w, window_strides=(1, 1), padding=((1, 1), (1, 1)),
            dimension_numbers=("NCHW", "OIHW", "NCHW"))

    out = conv(bn_relu(x, g1, b1), w1)
    out = conv(bn_relu(out, g2, b2), w2)
    return out + x


if __name__ == "__main__":
    N, C, H, W = 2, 8, 16, 16
    key = jax.random.PRNGKey(0)
    kx, kw1, kw2, kg1, kb1, kg2, kb2 = jax.random.split(key, 7)

    x = jax.random.normal(kx, (N, C, H, W), dtype=jnp.float32)
    # Conv2d(C, C, 3, padding=1, bias=False) weights: (C_out, C_in, 3, 3)
    fan_in = C * 3 * 3
    bound = 1.0 / np.sqrt(fan_in)
    w1 = jax.random.uniform(kw1, (C, C, 3, 3), jnp.float32, -bound, bound)
    w2 = jax.random.uniform(kw2, (C, C, 3, 3), jnp.float32, -bound, bound)
    # BatchNorm2d affine params (perturbed from the PyTorch defaults so the
    # affine path is actually exercised).
    g1 = 1.0 + 0.1 * jax.random.normal(kg1, (C,), jnp.float32)
    b1 = 0.1 * jax.random.normal(kb1, (C,), jnp.float32)
    g2 = 1.0 + 0.1 * jax.random.normal(kg2, (C,), jnp.float32)
    b2 = 0.1 * jax.random.normal(kb2, (C,), jnp.float32)

    out = jax.block_until_ready(residual_block_pallas(x, w1, g1, b1, w2, g2, b2))
    ref = jax.block_until_ready(residual_block_ref(x, w1, g1, b1, w2, g2, b2))
    np.testing.assert_allclose(np.asarray(out), np.asarray(ref),
                               rtol=1e-4, atol=1e-4)
    print("KERNEL_OK")
</pallas_src>

<mosaic_0001>
module attributes {stable_mosaic.version = 11 : i64} {
  func.func @_resblock_kernel(%arg0: memref<32x128xf32, #tpu.memory_space<vmem>>, %arg1: memref<2x32x32xf32, #tpu.memory_space<vmem>>, %arg2: memref<128x128xf32, #tpu.memory_space<vmem>>, %arg3: memref<3x128x128xf32, #tpu.memory_space<vmem>>, %arg4: memref<1x128xf32, #tpu.memory_space<vmem>>, %arg5: memref<1x128xf32, #tpu.memory_space<vmem>>, %arg6: memref<3x128x128xf32, #tpu.memory_space<vmem>>, %arg7: memref<1x128xf32, #tpu.memory_space<vmem>>, %arg8: memref<1x128xf32, #tpu.memory_space<vmem>>, %arg9: memref<32x128xf32, #tpu.memory_space<vmem>>) attributes {dimension_semantics = [], scalar_prefetch = 0 : i64, scratch_operands = 0 : i64, tpu.core_type = #tpu.core_type<tc>} {
    %c0 = arith.constant 0 : index
    %c0_0 = arith.constant 0 : index
    %0 = vector.load %arg0[%c0, %c0_0] : memref<32x128xf32, #tpu.memory_space<vmem>>, vector<32x128xf32>
    %c0_1 = arith.constant 0 : index
    %c0_2 = arith.constant 0 : index
    %1 = vector.load %arg2[%c0_1, %c0_2] : memref<128x128xf32, #tpu.memory_space<vmem>>, vector<128x128xf32>
    %c0_3 = arith.constant 0 : index
    %c0_4 = arith.constant 0 : index
    %c0_5 = arith.constant 0 : index
    %2 = vector.load %arg1[%c0_3, %c0_4, %c0_5] : memref<2x32x32xf32, #tpu.memory_space<vmem>>, vector<1x32x32xf32>
    %3 = vector.shape_cast %2 : vector<1x32x32xf32> to vector<32x32xf32>
    %c1 = arith.constant 1 : index
    %c0_6 = arith.constant 0 : index
    %c0_7 = arith.constant 0 : index
    %4 = vector.load %arg1[%c1, %c0_6, %c0_7] : memref<2x32x32xf32, #tpu.memory_space<vmem>>, vector<1x32x32xf32>
    %5 = vector.shape_cast %4 : vector<1x32x32xf32> to vector<32x32xf32>
    %c0_8 = arith.constant 0 : index
    %c0_9 = arith.constant 0 : index
    %6 = vector.load %arg4[%c0_8, %c0_9] : memref<1x128xf32, #tpu.memory_space<vmem>>, vector<1x128xf32>
    %c0_10 = arith.constant 0 : index
    %c0_11 = arith.constant 0 : index
    %7 = vector.load %arg5[%c0_10, %c0_11] : memref<1x128xf32, #tpu.memory_space<vmem>>, vector<1x128xf32>
    %cst = arith.constant dense<0.000000e+00> : vector<32x128xf32>
    %8 = tpu.matmul %0, %1, %cst {dimension_numbers = #tpu.dot_dimension_numbers<[1], [0], [0], [1], [0, 0, 1, 1], [], []>} : vector<32x128xf32>, vector<128x128xf32>, vector<32x128xf32> -> vector<32x128xf32>
    %cst_12 = arith.constant dense<0.000000e+00> : vector<128xf32>
    %9 = vector.multi_reduction <add>, %8, %cst_12 [0] : vector<32x128xf32> to vector<128xf32>
    %10 = vector.shape_cast %9 : vector<128xf32> to vector<1x128xf32>
    %cst_13 = arith.constant 0.001953125 : f32
    %11 = vector.broadcast %cst_13 : f32 to vector<1x128xf32>
    %12 = arith.mulf %10, %11 : vector<1x128xf32>
    %13 = arith.mulf %0, %0 : vector<32x128xf32>
    %cst_14 = arith.constant dense<0.000000e+00> : vector<32x128xf32>
    %14 = tpu.matmul %13, %1, %cst_14 {dimension_numbers = #tpu.dot_dimension_numbers<[1], [0], [0], [1], [0, 0, 1, 1], [], []>} : vector<32x128xf32>, vector<128x128xf32>, vector<32x128xf32> -> vector<32x128xf32>
    %cst_15 = arith.constant dense<0.000000e+00> : vector<128xf32>
    %15 = vector.multi_reduction <add>, %14, %cst_15 [0] : vector<32x128xf32> to vector<128xf32>
    %16 = vector.shape_cast %15 : vector<128xf32> to vector<1x128xf32>
    %cst_16 = arith.constant 0.001953125 : f32
    %17 = vector.broadcast %cst_16 : f32 to vector<1x128xf32>
    %18 = arith.mulf %16, %17 : vector<1x128xf32>
    %19 = arith.mulf %12, %12 : vector<1x128xf32>
    %20 = arith.subf %18, %19 : vector<1x128xf32>
    %cst_17 = arith.constant 9.99999974E-6 : f32
    %21 = vector.broadcast %cst_17 : f32 to vector<1x128xf32>
    %22 = arith.addf %20, %21 : vector<1x128xf32>
    %23 = math.rsqrt %22 : vector<1x128xf32>
    %24 = arith.mulf %6, %23 : vector<1x128xf32>
    %25 = arith.mulf %12, %24 : vector<1x128xf32>
    %26 = arith.subf %7, %25 : vector<1x128xf32>
    %27 = vector.broadcast %24 : vector<1x128xf32> to vector<32x128xf32>
    %28 = arith.mulf %0, %27 : vector<32x128xf32>
    %29 = vector.broadcast %26 : vector<1x128xf32> to vector<32x128xf32>
    %30 = arith.addf %28, %29 : vector<32x128xf32>
    %cst_18 = arith.constant 0.000000e+00 : f32
    %31 = vector.broadcast %cst_18 : f32 to vector<32x128xf32>
    %32 = arith.maximumf %30, %31 : vector<32x128xf32>
    %c1_19 = arith.constant 1 : index
    %c0_20 = arith.constant 0 : index
    %c0_21 = arith.constant 0 : index
    %33 = vector.load %arg3[%c1_19, %c0_20, %c0_21] : memref<3x128x128xf32, #tpu.memory_space<vmem>>, vector<1x128x128xf32>
    %34 = vector.shape_cast %33 : vector<1x128x128xf32> to vector<128x128xf32>
    %cst_22 = arith.constant dense<0.000000e+00> : vector<32x128xf32>
    %35 = tpu.matmul %32, %34, %cst_22 {dimension_numbers = #tpu.dot_dimension_numbers<[1], [0], [0], [1], [0, 0, 1, 1], [], []>} : vector<32x128xf32>, vector<128x128xf32>, vector<32x128xf32> -> vector<32x128xf32>
    %cst_23 = arith.constant dense<0.000000e+00> : vector<32x128xf32>
    %36 = tpu.matmul %3, %32, %cst_23 {dimension_numbers = #tpu.dot_dimension_numbers<[1], [0], [0], [1], [0, 0, 1, 1], [], []>} : vector<32x32xf32>, vector<32x128xf32>, vector<32x128xf32> -> vector<32x128xf32>
    %c0_24 = arith.constant 0 : index
    %c0_25 = arith.constant 0 : index
    %c0_26 = arith.constant 0 : index
    %37 = vector.load %arg3[%c0_24, %c0_25, %c0_26] : memref<3x128x128xf32, #tpu.memory_space<vmem>>, vector<1x128x128xf32>
    %38 = vector.shape_cast %37 : vector<1x128x128xf32> to vector<128x128xf32>
    %cst_27 = arith.constant dense<0.000000e+00> : vector<32x128xf32>
    %39 = tpu.matmul %36, %38, %cst_27 {dimension_numbers = #tpu.dot_dimension_numbers<[1], [0], [0], [1], [0, 0, 1, 1], [], []>} : vector<32x128xf32>, vector<128x128xf32>, vector<32x128xf32> -> vector<32x128xf32>
    %40 = arith.addf %35, %39 : vector<32x128xf32>
    %cst_28 = arith.constant dense<0.000000e+00> : vector<32x128xf32>
    %41 = tpu.matmul %5, %32, %cst_28 {dimension_numbers = #tpu.dot_dimension_numbers<[1], [0], [0], [1], [0, 0, 1, 1], [], []>} : vector<32x32xf32>, vector<32x128xf32>, vector<32x128xf32> -> vector<32x128xf32>
    %c2 = arith.constant 2 : index
    %c0_29 = arith.constant 0 : index
    %c0_30 = arith.constant 0 : index
    %42 = vector.load %arg3[%c2, %c0_29, %c0_30] : memref<3x128x128xf32, #tpu.memory_space<vmem>>, vector<1x128x128xf32>
    %43 = vector.shape_cast %42 : vector<1x128x128xf32> to vector<128x128xf32>
    %cst_31 = arith.constant dense<0.000000e+00> : vector<32x128xf32>
    %44 = tpu.matmul %41, %43, %cst_31 {dimension_numbers = #tpu.dot_dimension_numbers<[1], [0], [0], [1], [0, 0, 1, 1], [], []>} : vector<32x128xf32>, vector<128x128xf32>, vector<32x128xf32> -> vector<32x128xf32>
    %45 = arith.addf %40, %44 : vector<32x128xf32>
    %c0_32 = arith.constant 0 : index
    %c0_33 = arith.constant 0 : index
    %46 = vector.load %arg7[%c0_32, %c0_33] : memref<1x128xf32, #tpu.memory_space<vmem>>, vector<1x128xf32>
    %c0_34 = arith.constant 0 : index
    %c0_35 = arith.constant 0 : index
    %47 = vector.load %arg8[%c0_34, %c0_35] : memref<1x128xf32, #tpu.memory_space<vmem>>, vector<1x128xf32>
    %cst_36 = arith.constant dense<0.000000e+00> : vector<32x128xf32>
    %48 = tpu.matmul %45, %1, %cst_36 {dimension_numbers = #tpu.dot_dimension_numbers<[1], [0], [0], [1], [0, 0, 1, 1], [], []>} : vector<32x128xf32>, vector<128x128xf32>, vector<32x128xf32> -> vector<32x128xf32>
    %cst_37 = arith.constant dense<0.000000e+00> : vector<128xf32>
    %49 = vector.multi_reduction <add>, %48, %cst_37 [0] : vector<32x128xf32> to vector<128xf32>
    %50 = vector.shape_cast %49 : vector<128xf32> to vector<1x128xf32>
    %cst_38 = arith.constant 0.001953125 : f32
    %51 = vector.broadcast %cst_38 : f32 to vector<1x128xf32>
    %52 = arith.mulf %50, %51 : vector<1x128xf32>
    %53 = arith.mulf %45, %45 : vector<32x128xf32>
    %cst_39 = arith.constant dense<0.000000e+00> : vector<32x128xf32>
    %54 = tpu.matmul %53, %1, %cst_39 {dimension_numbers = #tpu.dot_dimension_numbers<[1], [0], [0], [1], [0, 0, 1, 1], [], []>} : vector<32x128xf32>, vector<128x128xf32>, vector<32x128xf32> -> vector<32x128xf32>
    %cst_40 = arith.constant dense<0.000000e+00> : vector<128xf32>
    %55 = vector.multi_reduction <add>, %54, %cst_40 [0] : vector<32x128xf32> to vector<128xf32>
    %56 = vector.shape_cast %55 : vector<128xf32> to vector<1x128xf32>
    %cst_41 = arith.constant 0.001953125 : f32
    %57 = vector.broadcast %cst_41 : f32 to vector<1x128xf32>
    %58 = arith.mulf %56, %57 : vector<1x128xf32>
    %59 = arith.mulf %52, %52 : vector<1x128xf32>
    %60 = arith.subf %58, %59 : vector<1x128xf32>
    %cst_42 = arith.constant 9.99999974E-6 : f32
    %61 = vector.broadcast %cst_42 : f32 to vector<1x128xf32>
    %62 = arith.addf %60, %61 : vector<1x128xf32>
    %63 = math.rsqrt %62 : vector<1x128xf32>
    %64 = arith.mulf %46, %63 : vector<1x128xf32>
    %65 = arith.mulf %52, %64 : vector<1x128xf32>
    %66 = arith.subf %47, %65 : vector<1x128xf32>
    %67 = vector.broadcast %64 : vector<1x128xf32> to vector<32x128xf32>
    %68 = arith.mulf %45, %67 : vector<32x128xf32>
    %69 = vector.broadcast %66 : vector<1x128xf32> to vector<32x128xf32>
    %70 = arith.addf %68, %69 : vector<32x128xf32>
    %cst_43 = arith.constant 0.000000e+00 : f32
    %71 = vector.broadcast %cst_43 : f32 to vector<32x128xf32>
    %72 = arith.maximumf %70, %71 : vector<32x128xf32>
    %c1_44 = arith.constant 1 : index
    %c0_45 = arith.constant 0 : index
    %c0_46 = arith.constant 0 : index
    %73 = vector.load %arg6[%c1_44, %c0_45, %c0_46] : memref<3x128x128xf32, #tpu.memory_space<vmem>>, vector<1x128x128xf32>
    %74 = vector.shape_cast %73 : vector<1x128x128xf32> to vector<128x128xf32>
    %cst_47 = arith.constant dense<0.000000e+00> : vector<32x128xf32>
    %75 = tpu.matmul %72, %74, %cst_47 {dimension_numbers = #tpu.dot_dimension_numbers<[1], [0], [0], [1], [0, 0, 1, 1], [], []>} : vector<32x128xf32>, vector<128x128xf32>, vector<32x128xf32> -> vector<32x128xf32>
    %cst_48 = arith.constant dense<0.000000e+00> : vector<32x128xf32>
    %76 = tpu.matmul %3, %72, %cst_48 {dimension_numbers = #tpu.dot_dimension_numbers<[1], [0], [0], [1], [0, 0, 1, 1], [], []>} : vector<32x32xf32>, vector<32x128xf32>, vector<32x128xf32> -> vector<32x128xf32>
    %c0_49 = arith.constant 0 : index
    %c0_50 = arith.constant 0 : index
    %c0_51 = arith.constant 0 : index
    %77 = vector.load %arg6[%c0_49, %c0_50, %c0_51] : memref<3x128x128xf32, #tpu.memory_space<vmem>>, vector<1x128x128xf32>
    %78 = vector.shape_cast %77 : vector<1x128x128xf32> to vector<128x128xf32>
    %cst_52 = arith.constant dense<0.000000e+00> : vector<32x128xf32>
    %79 = tpu.matmul %76, %78, %cst_52 {dimension_numbers = #tpu.dot_dimension_numbers<[1], [0], [0], [1], [0, 0, 1, 1], [], []>} : vector<32x128xf32>, vector<128x128xf32>, vector<32x128xf32> -> vector<32x128xf32>
    %80 = arith.addf %75, %79 : vector<32x128xf32>
    %cst_53 = arith.constant dense<0.000000e+00> : vector<32x128xf32>
    %81 = tpu.matmul %5, %72, %cst_53 {dimension_numbers = #tpu.dot_dimension_numbers<[1], [0], [0], [1], [0, 0, 1, 1], [], []>} : vector<32x32xf32>, vector<32x128xf32>, vector<32x128xf32> -> vector<32x128xf32>
    %c2_54 = arith.constant 2 : index
    %c0_55 = arith.constant 0 : index
    %c0_56 = arith.constant 0 : index
    %82 = vector.load %arg6[%c2_54, %c0_55, %c0_56] : memref<3x128x128xf32, #tpu.memory_space<vmem>>, vector<1x128x128xf32>
    %83 = vector.shape_cast %82 : vector<1x128x128xf32> to vector<128x128xf32>
    %cst_57 = arith.constant dense<0.000000e+00> : vector<32x128xf32>
    %84 = tpu.matmul %81, %83, %cst_57 {dimension_numbers = #tpu.dot_dimension_numbers<[1], [0], [0], [1], [0, 0, 1, 1], [], []>} : vector<32x128xf32>, vector<128x128xf32>, vector<32x128xf32> -> vector<32x128xf32>
    %85 = arith.addf %80, %84 : vector<32x128xf32>
    %86 = arith.addf %85, %0 : vector<32x128xf32>
    %c0_58 = arith.constant 0 : index
    %c0_59 = arith.constant 0 : index
    %87 = vector.load %arg9[%c0_58, %c0_59] : memref<32x128xf32, #tpu.memory_space<vmem>>, vector<32x128xf32>
    tpu.vector_store %arg9[%c0_58, %c0_59], %86 {strides = array<i32>} : memref<32x128xf32, #tpu.memory_space<vmem>>, vector<32x128xf32>,
    return
  }
}

</mosaic_0001>

<llo_original>
// kernel: tpu_custom_call.1
$region0: #{tpu_custom_call.1}
  #allocation0 [shape = 'u32[]', space=smem, size = 0x4, offset = 0x4, fixed_abs, tag = 'smem constant byte address 0x4 - core index']
  #allocation1 [shape = 'u32[144,128]{1,0:T(1,128)}', space=vmem, size = 0x12000, scoped, tag = 'internal scratch']
  %s0 = inlined_call_operand.hbm [shape: f32[32,128], index: 0, kind: input, shape index: {}]
  %s1 = inlined_call_operand.hbm [shape: f32[2,32,32], index: 1, kind: input, shape index: {}]
  %s2 = inlined_call_operand.hbm [shape: f32[128,128], index: 2, kind: input, shape index: {}]
  %s3 = inlined_call_operand.hbm [shape: f32[3,128,128], index: 3, kind: input, shape index: {}]
  %s4 = inlined_call_operand.vmem [shape: f32[1,128], index: 4, kind: input, shape index: {}]
  %s5 = inlined_call_operand.vmem [shape: f32[1,128], index: 5, kind: input, shape index: {}]
  %s6 = inlined_call_operand.hbm [shape: f32[3,128,128], index: 6, kind: input, shape index: {}]
  %s7 = inlined_call_operand.vmem [shape: f32[1,128], index: 7, kind: input, shape index: {}]
  %s8 = inlined_call_operand.vmem [shape: f32[1,128], index: 8, kind: input, shape index: {}]
  %s9 = inlined_call_operand.hbm [shape: f32[32,128], index: 9, kind: output, shape index: {}]
  %s10 = sld [smem:[#allocation0]]
  $region66: #{tpu_custom_call.1} parent=0
    _
  %s12 = ssub.s32 1, %s10
  %s13 = scalar_select 0, %s12, %s10
  $region1: #{tpu_custom_call.1} parent=0
    #allocation2 [shape = 'u8[16384]{0}', space=vmem, size = 0x4000, scoped, tag = 'input window, operand 0, single buffered']
    #allocation3 [shape = 's32[1]{0}', space=sflag, size = 0x4, scoped, tag = 'scoped memory for tpu_custom_call.1']
    #allocation4 [shape = 's32[1]{0}', space=sflag, size = 0x4, scoped, tag = 'scoped memory for tpu_custom_call.1']
    #allocation5 [shape = 'u8[32768]{0}', space=vmem, size = 0x8000, scoped, tag = 'input window, operand 1, single buffered']
    #allocation6 [shape = 's32[1]{0}', space=sflag, size = 0x4, scoped, tag = 'scoped memory for tpu_custom_call.1']
    #allocation7 [shape = 'u8[65536]{0}', space=vmem, size = 0x10000, scoped, tag = 'input window, operand 2, single buffered']
    #allocation8 [shape = 'u8[196608]{0}', space=vmem, size = 0x30000, scoped, tag = 'input window, operand 3, single buffered']
    #allocation9 [shape = 's32[1]{0}', space=sflag, size = 0x4, scoped, tag = 'scoped memory for tpu_custom_call.1']
    #allocation10 [shape = 'u8[196608]{0}', space=vmem, size = 0x30000, scoped, tag = 'input window, operand 6, single buffered']
    #allocation11 [shape = 'u8[16384]{0}', space=vmem, size = 0x4000, scoped, tag = 'output window, operand 0, single buffered']
    %14 = vsyncpa [#allocation3], 0
    %15 = vsyncpa [#allocation6], 0
    %16 = vsyncpa [#allocation9], 0
    %17 = vsyncpa [#allocation4], 0
    // Predicated region
    $region2: #{tpu_custom_call.1} parent=1 // pred_check
      _
    $region3: #{tpu_custom_call.1} parent=1 // pred_check_branch
      %19 = sbr.rel (0) target = $region5
    $region4: #{tpu_custom_call.1} parent=1 // pred_region
      %s21 = ssub.s32 512, 512
      %22 = vsyncadd [#allocation3], %s21
      %s23 = sshll.u32 [#allocation2], 4
      %s24 = int_to_ptr.vmem [resolvable:$true] %s23
      %29 = dma.hbm_to_vmem [thread:$0]  %s0, 512, %s24, [#allocation3], 128, 128, 8
    $region5: #{tpu_custom_call.1} parent=1 // pred_fallthru
      _
    // Predicated region
    $region6: #{tpu_custom_call.1} parent=1 // pred_check
      _
    $region7: #{tpu_custom_call.1} parent=1 // pred_check_branch
      %31 = sbr.rel (0) target = $region9
    $region8: #{tpu_custom_call.1} parent=1 // pred_region
      %s33 = ssub.s32 1024, 1024
      %34 = vsyncadd [#allocation6], %s33
      %s35 = sshll.u32 [#allocation5], 4
      %s36 = int_to_ptr.vmem [resolvable:$true] %s35
      %41 = dma.hbm_to_vmem [thread:$0]  %s1, 1024, %s36, [#allocation6], 128, 128, 8
    $region9: #{tpu_custom_call.1} parent=1 // pred_fallthru
      _
    // Predicated region
    $region10: #{tpu_custom_call.1} parent=1 // pred_check
      _
    $region11: #{tpu_custom_call.1} parent=1 // pred_check_branch
      %43 = sbr.rel (0) target = $region13
    $region12: #{tpu_custom_call.1} parent=1 // pred_region
      %s45 = ssub.s32 2048, 2048
      %46 = vsyncadd [#allocation6], %s45
      %s47 = sshll.u32 [#allocation7], 4
      %s48 = int_to_ptr.vmem [resolvable:$true] %s47
      %53 = dma.hbm_to_vmem [thread:$0]  %s2, 2048, %s48, [#allocation6], 128, 128, 8
    $region13: #{tpu_custom_call.1} parent=1 // pred_fallthru
      _
    // Predicated region
    $region14: #{tpu_custom_call.1} parent=1 // pred_check
      _
    $region15: #{tpu_custom_call.1} parent=1 // pred_check_branch
      %55 = sbr.rel (0) target = $region17
    $region16: #{tpu_custom_call.1} parent=1 // pred_region
      %s57 = ssub.s32 6144, 6144
      %58 = vsyncadd [#allocation9], %s57
      %s59 = sshll.u32 [#allocation8], 4
      %s60 = int_to_ptr.vmem [resolvable:$true] %s59
      %65 = dma.hbm_to_vmem [thread:$0]  %s3, 6144, %s60, [#allocation9], 128, 128, 8
    $region17: #{tpu_custom_call.1} parent=1 // pred_fallthru
      _
    // Predicated region
    $region18: #{tpu_custom_call.1} parent=1 // pred_check
      _
    $region19: #{tpu_custom_call.1} parent=1 // pred_check_branch
      %67 = sbr.rel (0) target = $region21
    $region20: #{tpu_custom_call.1} parent=1 // pred_region
      _
    $region21: #{tpu_custom_call.1} parent=1 // pred_fallthru
      _
    // Predicated region
    $region22: #{tpu_custom_call.1} parent=1 // pred_check
      _
    $region23: #{tpu_custom_call.1} parent=1 // pred_check_branch
      %69 = sbr.rel (0) target = $region25
    $region24: #{tpu_custom_call.1} parent=1 // pred_region
      _
    $region25: #{tpu_custom_call.1} parent=1 // pred_fallthru
      _
    // Predicated region
    $region26: #{tpu_custom_call.1} parent=1 // pred_check
      _
    $region27: #{tpu_custom_call.1} parent=1 // pred_check_branch
      %71 = sbr.rel (0) target = $region29
    $region28: #{tpu_custom_call.1} parent=1 // pred_region
      %s73 = ssub.s32 6144, 6144
      %74 = vsyncadd [#allocation9], %s73
      %s75 = sshll.u32 [#allocation10], 4
      %s76 = int_to_ptr.vmem [resolvable:$true] %s75
      %81 = dma.hbm_to_vmem [thread:$0]  %s6, 6144, %s76, [#allocation9], 128, 128, 8
    $region29: #{tpu_custom_call.1} parent=1 // pred_fallthru
      _
    // Predicated region
    $region30: #{tpu_custom_call.1} parent=1 // pred_check
      _
    $region31: #{tpu_custom_call.1} parent=1 // pred_check_branch
      %83 = sbr.rel (0) target = $region33
    $region32: #{tpu_custom_call.1} parent=1 // pred_region
      _
    $region33: #{tpu_custom_call.1} parent=1 // pred_fallthru
      _
    // Predicated region
    $region34: #{tpu_custom_call.1} parent=1 // pred_check
      _
    $region35: #{tpu_custom_call.1} parent=1 // pred_check_branch
      %85 = sbr.rel (0) target = $region37
    $region36: #{tpu_custom_call.1} parent=1 // pred_region
      _
    $region37: #{tpu_custom_call.1} parent=1 // pred_fallthru
      _
    // Predicated region
    $region38: #{tpu_custom_call.1} parent=1 // pred_check
      _
    $region39: #{tpu_custom_call.1} parent=1 // pred_check_branch
      %87 = sbr.rel (0) target = $region41
    $region40: #{tpu_custom_call.1} parent=1 // pred_region
      %88 = dma.done [#allocation3], 512
    $region41: #{tpu_custom_call.1} parent=1 // pred_fallthru
      _
    // Predicated region
    $region42: #{tpu_custom_call.1} parent=1 // pred_check
      _
    $region43: #{tpu_custom_call.1} parent=1 // pred_check_branch
      %90 = sbr.rel (0) target = $region45
    $region44: #{tpu_custom_call.1} parent=1 // pred_region
      %91 = dma.done [#allocation6], 1024
    $region45: #{tpu_custom_call.1} parent=1 // pred_fallthru
      _
    // Predicated region
    $region46: #{tpu_custom_call.1} parent=1 // pred_check
      _
    $region47: #{tpu_custom_call.1} parent=1 // pred_check_branch
      %93 = sbr.rel (0) target = $region49
    $region48: #{tpu_custom_call.1} parent=1 // pred_region
      %94 = dma.done [#allocation6], 2048
    $region49: #{tpu_custom_call.1} parent=1 // pred_fallthru
      _
    // Predicated region
    $region50: #{tpu_custom_call.1} parent=1 // pred_check
      _
    $region51: #{tpu_custom_call.1} parent=1 // pred_check_branch
      %96 = sbr.rel (0) target = $region53
    $region52: #{tpu_custom_call.1} parent=1 // pred_region
      %97 = dma.done [#allocation9], 6144
    $region53: #{tpu_custom_call.1} parent=1 // pred_fallthru
      _
    // Predicated region
    $region54: #{tpu_custom_call.1} parent=1 // pred_check
      _
    $region55: #{tpu_custom_call.1} parent=1 // pred_check_branch
      %99 = sbr.rel (0) target = $region57
    $region56: #{tpu_custom_call.1} parent=1 // pred_region
      %100 = dma.done [#allocation9], 6144
    $region57: #{tpu_custom_call.1} parent=1 // pred_fallthru
      _
    %v101 = vld [vmem:[#allocation2] sm:$0xff]
    %v102 = vld [vmem:[#allocation2 + $0x8] sm:$0xff]
    %v103 = vld [vmem:[#allocation2 + $0x10] sm:$0xff]
    %v104 = vld [vmem:[#allocation2 + $0x18] sm:$0xff]
    %v105 = vld [vmem:[#allocation7] sm:$0xff]
    %v106 = vld [vmem:[#allocation7 + $0x8] sm:$0xff]
    %v107 = vld [vmem:[#allocation7 + $0x10] sm:$0xff]
    %v108 = vld [vmem:[#allocation7 + $0x18] sm:$0xff]
    %v109 = vld [vmem:[#allocation7 + $0x20] sm:$0xff]
    %v110 = vld [vmem:[#allocation7 + $0x28] sm:$0xff]
    %v111 = vld [vmem:[#allocation7 + $0x30] sm:$0xff]
    %v112 = vld [vmem:[#allocation7 + $0x38] sm:$0xff]
    %v113 = vld [vmem:[#allocation7 + $0x40] sm:$0xff]
    %v114 = vld [vmem:[#allocation7 + $0x48] sm:$0xff]
    %v115 = vld [vmem:[#allocation7 + $0x50] sm:$0xff]
    %v116 = vld [vmem:[#allocation7 + $0x58] sm:$0xff]
    %v117 = vld [vmem:[#allocation7 + $0x60] sm:$0xff]
    %v118 = vld [vmem:[#allocation7 + $0x68] sm:$0xff]
    %v119 = vld [vmem:[#allocation7 + $0x70] sm:$0xff]
    %v120 = vld [vmem:[#allocation7 + $0x78] sm:$0xff]
    %v121 = vld [vmem:[#allocation5] sm:$0xff]
    %v122 = vld [vmem:[#allocation5 + $0x8] sm:$0xff]
    %v123 = vld [vmem:[#allocation5 + $0x10] sm:$0xff]
    %v124 = vld [vmem:[#allocation5 + $0x18] sm:$0xff]
    %s125 = scalar_lea.vmem [#allocation5], 32
    %v126 = vld [vmem:[%s125] sm:$0xff]
    %v127 = vld [vmem:[%s125 + $0x8] sm:$0xff]
    %v128 = vld [vmem:[%s125 + $0x10] sm:$0xff]
    %v129 = vld [vmem:[%s125 + $0x18] sm:$0xff]
    %v130 = vld [vmem:[%s4] sm:$0x1]
    %v131 = vld [vmem:[%s5] sm:$0x1]
    %132 = vmatprep.subr.mxu0 0.0
    %133 = vmatpush1.msra.mxu0 %v120
    %134 = vmatprep.subr.mxu0 0.0
    %135 = vmatpush1.msra.mxu0 %v119
    %136 = vmatprep.subr.mxu0 0.0
    %137 = vmatpush1.msra.mxu0 %v118
    %138 = vmatprep.subr.mxu0 0.0
    %139 = vmatpush1.msra.mxu0 %v117
    %140 = vmatprep.subr.mxu0 0.0
    %141 = vmatpush1.msra.mxu0 %v116
    %142 = vmatprep.subr.mxu0 0.0
    %143 = vmatpush1.msra.mxu0 %v115
    %144 = vmatprep.subr.mxu0 0.0
    %145 = vmatpush1.msra.mxu0 %v114
    %146 = vmatprep.subr.mxu0 0.0
    %147 = vmatpush1.msra.mxu0 %v113
    %148 = vmatprep.subr.mxu0 0.0
    %149 = vmatpush1.msra.mxu0 %v112
    %150 = vmatprep.subr.mxu0 0.0
    %151 = vmatpush1.msra.mxu0 %v111
    %152 = vmatprep.subr.mxu0 0.0
    %153 = vmatpush1.msra.mxu0 %v110
    %154 = vmatprep.subr.mxu0 0.0
    %155 = vmatpush1.msra.mxu0 %v109
    %156 = vmatprep.subr.mxu0 0.0
    %157 = vmatpush1.msra.mxu0 %v108
    %158 = vmatprep.subr.mxu0 0.0
    %159 = vmatpush1.msra.mxu0 %v107
    %160 = vmatprep.subr.mxu0 0.0
    %161 = vmatpush1.msra.mxu0 %v106
    %162 = vmatprep.subr.mxu0 0.0
    %163 = vmatpush1.msra.mxu0 %v105
    %164 = vmatprep.subr.mxu0 0.0
    %165 = vmatpush2.msra.mxu0 0.0
    %166 = vmatprep.subr.mxu0 0.0
    %167 = vmatpush2.msra.mxu0 0.0
    %168 = vmatprep.subr.mxu0 0.0
    %169 = vmatpush2.msra.mxu0 0.0
    %170 = vmatprep.subr.mxu0 0.0
    %171 = vmatpush2.msra.mxu0 0.0
    %172 = vmatprep.subr.mxu0 0.0
    %173 = vmatpush2.msra.mxu0 0.0
    %174 = vmatprep.subr.mxu0 0.0
    %175 = vmatpush2.msra.mxu0 0.0
    %176 = vmatprep.subr.mxu0 0.0
    %177 = vmatpush2.msra.mxu0 0.0
    %178 = vmatprep.subr.mxu0 0.0
    %179 = vmatpush2.msra.mxu0 0.0
    %180 = vmatprep.subr.mxu0 0.0
    %181 = vmatpush2.msra.mxu0 0.0
    %182 = vmatprep.subr.mxu0 0.0
    %183 = vmatpush2.msra.mxu0 0.0
    %184 = vmatprep.subr.mxu0 0.0
    %185 = vmatpush2.msra.mxu0 0.0
    %186 = vmatprep.subr.mxu0 0.0
    %187 = vmatpush2.msra.mxu0 0.0
    %188 = vmatprep.subr.mxu0 0.0
    %189 = vmatpush2.msra.mxu0 0.0
    %190 = vmatprep.subr.mxu0 0.0
    %191 = vmatpush2.msra.mxu0 0.0
    %192 = vmatprep.subr.mxu0 0.0
    %193 = vmatpush2.msra.mxu0 0.0
    %194 = vmatprep.subr.mxu0 0.0
    %195 = vmatpush2.msra.mxu0 0.0
    %196 = vmatprep.mubr.f32.mxu0 0.0
    %197 = vmatmul.mubr.f32.gmra.mxu0 %v101
    %v198 = vpop.f32.mrf.mxu0
    %v199 = vadd.f32 0.0, %v198
    %v200 = vpop.f32.mrf.mxu0
    %201 = vmatprep.mubr.f32.mxu0 0.0
    %202 = vmatmul.mubr.f32.gmra.mxu0 %v102
    %v203 = vpop.f32.mrf.mxu0
    %v204 = vadd.f32 0.0, %v203
    %v205 = vpop.f32.mrf.mxu0
    %206 = vmatprep.mubr.f32.mxu0 0.0
    %207 = vmatmul.mubr.f32.gmra.mxu0 %v103
    %v208 = vpop.f32.mrf.mxu0
    %v209 = vadd.f32 0.0, %v208
    %v210 = vpop.f32.mrf.mxu0
    %211 = vmatprep.mubr.f32.mxu0 0.0
    %212 = vmatmul.mubr.f32.gmra.mxu0 %v104
    %v213 = vpop.f32.mrf.mxu0
    %v214 = vadd.f32 0.0, %v213
    %v215 = vpop.f32.mrf.mxu0
    %216 = vdwg.mxu0
    %v217 = vadd.f32 %v199, %v204
    %v218 = vadd.f32 %v217, %v209
    %v219 = vadd.f32 %v218, %v214
    %v220 = vrot.slane %v219, 4
    %v221 = vadd.f32 %v219, %v220
    %v222 = vrot.slane %v221, 2
    %v223 = vadd.f32 %v221, %v222
    %v224 = vrot.slane %v223, 1
    %v225 = vadd.f32 %v223, %v224
    %v226 = vmul.f32 %v225, 0.001953125
    %v227 = vmul.f32 %v101, %v101
    %v228 = vmul.f32 %v102, %v102
    %v229 = vmul.f32 %v103, %v103
    %v230 = vmul.f32 %v104, %v104
    %231 = vmatprep.subr.mxu0 0.0
    %232 = vmatpush1.msra.mxu0 %v120
    %233 = vmatprep.subr.mxu0 0.0
    %234 = vmatpush1.msra.mxu0 %v119
    %235 = vmatprep.subr.mxu0 0.0
    %236 = vmatpush1.msra.mxu0 %v118
    %237 = vmatprep.subr.mxu0 0.0
    %238 = vmatpush1.msra.mxu0 %v117
    %239 = vmatprep.subr.mxu0 0.0
    %240 = vmatpush1.msra.mxu0 %v116
    %241 = vmatprep.subr.mxu0 0.0
    %242 = vmatpush1.msra.mxu0 %v115
    %243 = vmatprep.subr.mxu0 0.0
    %244 = vmatpush1.msra.mxu0 %v114
    %245 = vmatprep.subr.mxu0 0.0
    %246 = vmatpush1.msra.mxu0 %v113
    %247 = vmatprep.subr.mxu0 0.0
    %248 = vmatpush1.msra.mxu0 %v112
    %249 = vmatprep.subr.mxu0 0.0
    %250 = vmatpush1.msra.mxu0 %v111
    %251 = vmatprep.subr.mxu0 0.0
    %252 = vmatpush1.msra.mxu0 %v110
    %253 = vmatprep.subr.mxu0 0.0
    %254 = vmatpush1.msra.mxu0 %v109
    %255 = vmatprep.subr.mxu0 0.0
    %256 = vmatpush1.msra.mxu0 %v108
    %257 = vmatprep.subr.mxu0 0.0
    %258 = vmatpush1.msra.mxu0 %v107
    %259 = vmatprep.subr.mxu0 0.0
    %260 = vmatpush1.msra.mxu0 %v106
    %261 = vmatprep.subr.mxu0 0.0
    %262 = vmatpush1.msra.mxu0 %v105
    %263 = vmatprep.subr.mxu0 0.0
    %264 = vmatpush2.msra.mxu0 0.0
    %265 = vmatprep.subr.mxu0 0.0
    %266 = vmatpush2.msra.mxu0 0.0
    %267 = vmatprep.subr.mxu0 0.0
    %268 = vmatpush2.msra.mxu0 0.0
    %269 = vmatprep.subr.mxu0 0.0
    %270 = vmatpush2.msra.mxu0 0.0
    %271 = vmatprep.subr.mxu0 0.0
    %272 = vmatpush2.msra.mxu0 0.0
    %273 = vmatprep.subr.mxu0 0.0
    %274 = vmatpush2.msra.mxu0 0.0
    %275 = vmatprep.subr.mxu0 0.0
    %276 = vmatpush2.msra.mxu0 0.0
    %277 = vmatprep.subr.mxu0 0.0
    %278 = vmatpush2.msra.mxu0 0.0
    %279 = vmatprep.subr.mxu0 0.0
    %280 = vmatpush2.msra.mxu0 0.0
    %281 = vmatprep.subr.mxu0 0.0
    %282 = vmatpush2.msra.mxu0 0.0
    %283 = vmatprep.subr.mxu0 0.0
    %284 = vmatpush2.msra.mxu0 0.0
    %285 = vmatprep.subr.mxu0 0.0
    %286 = vmatpush2.msra.mxu0 0.0
    %287 = vmatprep.subr.mxu0 0.0
    %288 = vmatpush2.msra.mxu0 0.0
    %289 = vmatprep.subr.mxu0 0.0
    %290 = vmatpush2.msra.mxu0 0.0
    %291 = vmatprep.subr.mxu0 0.0
    %292 = vmatpush2.msra.mxu0 0.0
    %293 = vmatprep.subr.mxu0 0.0
    %294 = vmatpush2.msra.mxu0 0.0
    %295 = vmatprep.mubr.f32.mxu0 0.0
    %296 = vmatmul.mubr.f32.gmra.mxu0 %v227
    %v297 = vpop.f32.mrf.mxu0
    %v298 = vadd.f32 0.0, %v297
    %v299 = vpop.f32.mrf.mxu0
    %300 = vmatprep.mubr.f32.mxu0 0.0
    %301 = vmatmul.mubr.f32.gmra.mxu0 %v228
    %v302 = vpop.f32.mrf.mxu0
    %v303 = vadd.f32 0.0, %v302
    %v304 = vpop.f32.mrf.mxu0
    %305 = vmatprep.mubr.f32.mxu0 0.0
    %306 = vmatmul.mubr.f32.gmra.mxu0 %v229
    %v307 = vpop.f32.mrf.mxu0
    %v308 = vadd.f32 0.0, %v307
    %v309 = vpop.f32.mrf.mxu0
    %310 = vmatprep.mubr.f32.mxu0 0.0
    %311 = vmatmul.mubr.f32.gmra.mxu0 %v230
    %v312 = vpop.f32.mrf.mxu0
    %v313 = vadd.f32 0.0, %v312
    %v314 = vpop.f32.mrf.mxu0
    %315 = vdwg.mxu0
    %v316 = vadd.f32 %v298, %v303
    %v317 = vadd.f32 %v316, %v308
    %v318 = vadd.f32 %v317, %v313
    %v319 = vrot.slane %v318, 4
    %v320 = vadd.f32 %v318, %v319
    %v321 = vrot.slane %v320, 2
    %v322 = vadd.f32 %v320, %v321
    %v323 = vrot.slane %v322, 1
    %v324 = vadd.f32 %v322, %v323
    %v325 = vmul.f32 %v324, 0.001953125
    %v326 = vmul.f32 %v226, %v226
    %v327 = vsub.f32 %v325, %v326
    %v328 = vadd.f32 %v327, 1e-05
    %v329 = vrsqrt.pop %v328
    %v330 = vmul.f32 %v130, %v329
    %v331 = vmul.f32 %v226, %v330
    %v332 = vsub.f32 %v131, %v331
    %v334 = vlaneseq
    %v335 = vshrl.u32 %v334, 7
    %v336 = vsub.s32 0, %v335
    %v337 = vrot.slane %v330, %v336
    %v339 = vmul.f32 %v101, %v337
    %v340 = vmul.f32 %v102, %v337
    %v341 = vmul.f32 %v103, %v337
    %v342 = vmul.f32 %v104, %v337
    %v344 = vlaneseq
    %v345 = vshrl.u32 %v344, 7
    %v346 = vsub.s32 0, %v345
    %v347 = vrot.slane %v332, %v346
    %v349 = vadd.f32 %v339, %v347
    %v350 = vadd.f32 %v340, %v347
    %v351 = vadd.f32 %v341, %v347
    %v352 = vadd.f32 %v342, %v347
    %v353 = vmax.f32 %v349, 0.0
    %v354 = vmax.f32 %v350, 0.0
    %v355 = vmax.f32 %v351, 0.0
    %v356 = vmax.f32 %v352, 0.0
    %s357 = scalar_lea.vmem [#allocation8], 128
    %v358 = vld [vmem:[%s357] sm:$0xff]
    %v359 = vld [vmem:[%s357 + $0x8] sm:$0xff]
    %v360 = vld [vmem:[%s357 + $0x10] sm:$0xff]
    %v361 = vld [vmem:[%s357 + $0x18] sm:$0xff]
    %v362 = vld [vmem:[%s357 + $0x20] sm:$0xff]
    %v363 = vld [vmem:[%s357 + $0x28] sm:$0xff]
    %v364 = vld [vmem:[%s357 + $0x30] sm:$0xff]
    %v365 = vld [vmem:[%s357 + $0x38] sm:$0xff]
    %v366 = vld [vmem:[%s357 + $0x40] sm:$0xff]
    %v367 = vld [vmem:[%s357 + $0x48] sm:$0xff]
    %v368 = vld [vmem:[%s357 + $0x50] sm:$0xff]
    %v369 = vld [vmem:[%s357 + $0x58] sm:$0xff]
    %v370 = vld [vmem:[%s357 + $0x60] sm:$0xff]
    %v371 = vld [vmem:[%s357 + $0x68] sm:$0xff]
    %v372 = vld [vmem:[%s357 + $0x70] sm:$0xff]
    %v373 = vld [vmem:[%s357 + $0x78] sm:$0xff]
    %vm374 = vcmask 261120
    %v376 = vsel %vm374, %v121, 0
    %v379 = vsel %vm374, %v122, 0
    %v382 = vsel %vm374, %v123, 0
    %v385 = vsel %vm374, %v124, 0
    %387 = vmatprep.subr.mxu0 0.0
    %388 = vmatpush1.msra.mxu0 0.0
    %389 = vmatprep.subr.mxu0 0.0
    %390 = vmatpush1.msra.mxu0 0.0
    %391 = vmatprep.subr.mxu0 0.0
    %392 = vmatpush1.msra.mxu0 0.0
    %393 = vmatprep.subr.mxu0 0.0
    %394 = vmatpush1.msra.mxu0 0.0
    %395 = vmatprep.subr.mxu0 0.0
    %396 = vmatpush1.msra.mxu0 0.0
    %397 = vmatprep.subr.mxu0 0.0
    %398 = vmatpush1.msra.mxu0 0.0
    %399 = vmatprep.subr.mxu0 0.0
    %400 = vmatpush1.msra.mxu0 0.0
    %401 = vmatprep.subr.mxu0 0.0
    %402 = vmatpush1.msra.mxu0 0.0
    %403 = vmatprep.subr.mxu0 0.0
    %404 = vmatpush1.msra.mxu0 0.0
    %405 = vmatprep.subr.mxu0 0.0
    %406 = vmatpush1.msra.mxu0 0.0
    %407 = vmatprep.subr.mxu0 0.0
    %408 = vmatpush1.msra.mxu0 0.0
    %409 = vmatprep.subr.mxu0 0.0
    %410 = vmatpush1.msra.mxu0 0.0
    %411 = vmatprep.subr.mxu0 0.0
    %412 = vmatpush1.msra.mxu0 %v356
    %413 = vmatprep.subr.mxu0 0.0
    %414 = vmatpush1.msra.mxu0 %v355
    %415 = vmatprep.subr.mxu0 0.0
    %416 = vmatpush1.msra.mxu0 %v354
    %417 = vmatprep.subr.mxu0 0.0
    %418 = vmatpush1.msra.mxu0 %v353
    %419 = vmatprep.subr.mxu0 0.0
    %420 = vmatpush2.msra.mxu0 0.0
    %421 = vmatprep.subr.mxu0 0.0
    %422 = vmatpush2.msra.mxu0 0.0
    %423 = vmatprep.subr.mxu0 0.0
    %424 = vmatpush2.msra.mxu0 0.0
    %425 = vmatprep.subr.mxu0 0.0
    %426 = vmatpush2.msra.mxu0 0.0
    %427 = vmatprep.subr.mxu0 0.0
    %428 = vmatpush2.msra.mxu0 0.0
    %429 = vmatprep.subr.mxu0 0.0
    %430 = vmatpush2.msra.mxu0 0.0
    %431 = vmatprep.subr.mxu0 0.0
    %432 = vmatpush2.msra.mxu0 0.0
    %433 = vmatprep.subr.mxu0 0.0
    %434 = vmatpush2.msra.mxu0 0.0
    %435 = vmatprep.subr.mxu0 0.0
    %436 = vmatpush2.msra.mxu0 0.0
    %437 = vmatprep.subr.mxu0 0.0
    %438 = vmatpush2.msra.mxu0 0.0
    %439 = vmatprep.subr.mxu0 0.0
    %440 = vmatpush2.msra.mxu0 0.0
    %441 = vmatprep.subr.mxu0 0.0
    %442 = vmatpush2.msra.mxu0 0.0
    %443 = vmatprep.subr.mxu0 0.0
    %444 = vmatpush2.msra.mxu0 0.0
    %445 = vmatprep.subr.mxu0 0.0
    %446 = vmatpush2.msra.mxu0 0.0
    %447 = vmatprep.subr.mxu0 0.0
    %448 = vmatpush2.msra.mxu0 0.0
    %449 = vmatprep.subr.mxu0 0.0
    %450 = vmatpush2.msra.mxu0 0.0
    %451 = vmatprep.mubr.f32.mxu0 0.0
    %452 = vmatmul.mubr.f32.gmra.mxu0 %v376
    %v453 = vpop.f32.mrf.mxu0
    %v454 = vadd.f32 0.0, %v453
    %v455 = vpop.f32.mrf.mxu0
    %456 = vmatprep.mubr.f32.mxu0 0.0
    %457 = vmatmul.mubr.f32.gmra.mxu0 %v379
    %v458 = vpop.f32.mrf.mxu0
    %v459 = vadd.f32 0.0, %v458
    %v460 = vpop.f32.mrf.mxu0
    %461 = vmatprep.mubr.f32.mxu0 0.0
    %462 = vmatmul.mubr.f32.gmra.mxu0 %v382
    %v463 = vpop.f32.mrf.mxu0
    %v464 = vadd.f32 0.0, %v463
    %v465 = vpop.f32.mrf.mxu0
    %466 = vmatprep.mubr.f32.mxu0 0.0
    %467 = vmatmul.mubr.f32.gmra.mxu0 %v385
    %v468 = vpop.f32.mrf.mxu0
    %v469 = vadd.f32 0.0, %v468
    %v470 = vpop.f32.mrf.mxu0
    %471 = vdwg.mxu0
    %v472 = vld [vmem:[#allocation8] sm:$0xff]
    %v473 = vld [vmem:[#allocation8 + $0x8] sm:$0xff]
    %v474 = vld [vmem:[#allocation8 + $0x10] sm:$0xff]
    %v475 = vld [vmem:[#allocation8 + $0x18] sm:$0xff]
    %v476 = vld [vmem:[#allocation8 + $0x20] sm:$0xff]
    %v477 = vld [vmem:[#allocation8 + $0x28] sm:$0xff]
    %v478 = vld [vmem:[#allocation8 + $0x30] sm:$0xff]
    %v479 = vld [vmem:[#allocation8 + $0x38] sm:$0xff]
    %v480 = vld [vmem:[#allocation8 + $0x40] sm:$0xff]
    %v481 = vld [vmem:[#allocation8 + $0x48] sm:$0xff]
    %v482 = vld [vmem:[#allocation8 + $0x50] sm:$0xff]
    %v483 = vld [vmem:[#allocation8 + $0x58] sm:$0xff]
    %v484 = vld [vmem:[#allocation8 + $0x60] sm:$0xff]
    %v485 = vld [vmem:[#allocation8 + $0x68] sm:$0xff]
    %v486 = vld [vmem:[#allocation8 + $0x70] sm:$0xff]
    %v487 = vld [vmem:[#allocation8 + $0x78] sm:$0xff]
    %488 = vmatprep.subr.mxu0 0.0
    %489 = vmatpush1.msra.mxu0 %v487
    %490 = vmatprep.subr.mxu0 0.0
    %491 = vmatpush1.msra.mxu0 %v486
    %492 = vmatprep.subr.mxu0 0.0
    %493 = vmatpush1.msra.mxu0 %v485
    %494 = vmatprep.subr.mxu0 0.0
    %495 = vmatpush1.msra.mxu0 %v484
    %496 = vmatprep.subr.mxu0 0.0
    %497 = vmatpush1.msra.mxu0 %v483
    %498 = vmatprep.subr.mxu0 0.0
    %499 = vmatpush1.msra.mxu0 %v482
    %500 = vmatprep.subr.mxu0 0.0
    %501 = vmatpush1.msra.mxu0 %v481
    %502 = vmatprep.subr.mxu0 0.0
    %503 = vmatpush1.msra.mxu0 %v480
    %504 = vmatprep.subr.mxu0 0.0
    %505 = vmatpush1.msra.mxu0 %v479
    %506 = vmatprep.subr.mxu0 0.0
    %507 = vmatpush1.msra.mxu0 %v478
    %508 = vmatprep.subr.mxu0 0.0
    %509 = vmatpush1.msra.mxu0 %v477
    %510 = vmatprep.subr.mxu0 0.0
    %511 = vmatpush1.msra.mxu0 %v476
    %512 = vmatprep.subr.mxu0 0.0
    %513 = vmatpush1.msra.mxu0 %v475
    %514 = vmatprep.subr.mxu0 0.0
    %515 = vmatpush1.msra.mxu0 %v474
    %516 = vmatprep.subr.mxu0 0.0
    %517 = vmatpush1.msra.mxu0 %v473
    %518 = vmatprep.subr.mxu0 0.0
    %519 = vmatpush1.msra.mxu0 %v472
    %520 = vmatprep.subr.mxu0 0.0
    %521 = vmatpush2.msra.mxu0 0.0
    %522 = vmatprep.subr.mxu0 0.0
    %523 = vmatpush2.msra.mxu0 0.0
    %524 = vmatprep.subr.mxu0 0.0
    %525 = vmatpush2.msra.mxu0 0.0
    %526 = vmatprep.subr.mxu0 0.0
    %527 = vmatpush2.msra.mxu0 0.0
    %528 = vmatprep.subr.mxu0 0.0
    %529 = vmatpush2.msra.mxu0 0.0
    %530 = vmatprep.subr.mxu0 0.0
    %531 = vmatpush2.msra.mxu0 0.0
    %532 = vmatprep.subr.mxu0 0.0
    %533 = vmatpush2.msra.mxu0 0.0
    %534 = vmatprep.subr.mxu0 0.0
    %535 = vmatpush2.msra.mxu0 0.0
    %536 = vmatprep.subr.mxu0 0.0
    %537 = vmatpush2.msra.mxu0 0.0
    %538 = vmatprep.subr.mxu0 0.0
    %539 = vmatpush2.msra.mxu0 0.0
    %540 = vmatprep.subr.mxu0 0.0
    %541 = vmatpush2.msra.mxu0 0.0
    %542 = vmatprep.subr.mxu0 0.0
    %543 = vmatpush2.msra.mxu0 0.0
    %544 = vmatprep.subr.mxu0 0.0
    %545 = vmatpush2.msra.mxu0 0.0
    %546 = vmatprep.subr.mxu0 0.0
    %547 = vmatpush2.msra.mxu0 0.0
    %548 = vmatprep.subr.mxu0 0.0
    %549 = vmatpush2.msra.mxu0 0.0
    %550 = vmatprep.subr.mxu0 0.0
    %551 = vmatpush2.msra.mxu0 0.0
    %552 = vmatprep.mubr.f32.mxu0 0.0
    %553 = vmatmul.mubr.f32.gmra.mxu0 %v454
    %v554 = vpop.f32.mrf.mxu0
    %v555 = vadd.f32 0.0, %v554
    %v556 = vpop.f32.mrf.mxu0
    %557 = vmatprep.mubr.f32.mxu0 0.0
    %558 = vmatmul.mubr.f32.gmra.mxu0 %v459
    %v559 = vpop.f32.mrf.mxu0
    %v560 = vadd.f32 0.0, %v559
    %v561 = vpop.f32.mrf.mxu0
    %562 = vmatprep.mubr.f32.mxu0 0.0
    %563 = vmatmul.mubr.f32.gmra.mxu0 %v464
    %v564 = vpop.f32.mrf.mxu0
    %v565 = vadd.f32 0.0, %v564
    %v566 = vpop.f32.mrf.mxu0
    %567 = vmatprep.mubr.f32.mxu0 0.0
    %568 = vmatmul.mubr.f32.gmra.mxu0 %v469
    %v569 = vpop.f32.mrf.mxu0
    %v570 = vadd.f32 0.0, %v569
    %v571 = vpop.f32.mrf.mxu0
    %572 = vdwg.mxu0
    %573 = vmatprep.subr.mxu0 0.0
    %574 = vmatpush1.msra.mxu0 %v373
    %575 = vmatprep.subr.mxu0 0.0
    %576 = vmatpush1.msra.mxu0 %v372
    %577 = vmatprep.subr.mxu0 0.0
    %578 = vmatpush1.msra.mxu0 %v371
    %579 = vmatprep.subr.mxu0 0.0
    %580 = vmatpush1.msra.mxu0 %v370
    %581 = vmatprep.subr.mxu0 0.0
    %582 = vmatpush1.msra.mxu0 %v369
    %583 = vmatprep.subr.mxu0 0.0
    %584 = vmatpush1.msra.mxu0 %v368
    %585 = vmatprep.subr.mxu0 0.0
    %586 = vmatpush1.msra.mxu0 %v367
    %587 = vmatprep.subr.mxu0 0.0
    %588 = vmatpush1.msra.mxu0 %v366
    %589 = vmatprep.subr.mxu0 0.0
    %590 = vmatpush1.msra.mxu0 %v365
    %591 = vmatprep.subr.mxu0 0.0
    %592 = vmatpush1.msra.mxu0 %v364
    %593 = vmatprep.subr.mxu0 0.0
    %594 = vmatpush1.msra.mxu0 %v363
    %595 = vmatprep.subr.mxu0 0.0
    %596 = vmatpush1.msra.mxu0 %v362
    %597 = vmatprep.subr.mxu0 0.0
    %598 = vmatpush1.msra.mxu0 %v361
    %599 = vmatprep.subr.mxu0 0.0
    %600 = vmatpush1.msra.mxu0 %v360
    %601 = vmatprep.subr.mxu0 0.0
    %602 = vmatpush1.msra.mxu0 %v359
    %603 = vmatprep.subr.mxu0 0.0
    %604 = vmatpush1.msra.mxu0 %v358
    %605 = vmatprep.subr.mxu0 0.0
    %606 = vmatpush2.msra.mxu0 0.0
    %607 = vmatprep.subr.mxu0 0.0
    %608 = vmatpush2.msra.mxu0 0.0
    %609 = vmatprep.subr.mxu0 0.0
    %610 = vmatpush2.msra.mxu0 0.0
    %611 = vmatprep.subr.mxu0 0.0
    %612 = vmatpush2.msra.mxu0 0.0
    %613 = vmatprep.subr.mxu0 0.0
    %614 = vmatpush2.msra.mxu0 0.0
    %615 = vmatprep.subr.mxu0 0.0
    %616 = vmatpush2.msra.mxu0 0.0
    %617 = vmatprep.subr.mxu0 0.0
    %618 = vmatpush2.msra.mxu0 0.0
    %619 = vmatprep.subr.mxu0 0.0
    %620 = vmatpush2.msra.mxu0 0.0
    %621 = vmatprep.subr.mxu0 0.0
    %622 = vmatpush2.msra.mxu0 0.0
    %623 = vmatprep.subr.mxu0 0.0
    %624 = vmatpush2.msra.mxu0 0.0
    %625 = vmatprep.subr.mxu0 0.0
    %626 = vmatpush2.msra.mxu0 0.0
    %627 = vmatprep.subr.mxu0 0.0
    %628 = vmatpush2.msra.mxu0 0.0
    %629 = vmatprep.subr.mxu0 0.0
    %630 = vmatpush2.msra.mxu0 0.0
    %631 = vmatprep.subr.mxu0 0.0
    %632 = vmatpush2.msra.mxu0 0.0
    %633 = vmatprep.subr.mxu0 0.0
    %634 = vmatpush2.msra.mxu0 0.0
    %635 = vmatprep.subr.mxu0 0.0
    %636 = vmatpush2.msra.mxu0 0.0
    %637 = vmatprep.mubr.f32.mxu0 0.0
    %638 = vmatmul.mubr.f32.gmra.mxu0 %v353
    %v639 = vpop.f32.mrf.mxu0
    %v640 = vadd.f32 %v555, %v639
    %v641 = vpop.f32.mrf.mxu0
    %642 = vmatprep.mubr.f32.mxu0 0.0
    %643 = vmatmul.mubr.f32.gmra.mxu0 %v354
    %v644 = vpop.f32.mrf.mxu0
    %v645 = vadd.f32 %v560, %v644
    %v646 = vpop.f32.mrf.mxu0
    %647 = vmatprep.mubr.f32.mxu0 0.0
    %648 = vmatmul.mubr.f32.gmra.mxu0 %v355
    %v649 = vpop.f32.mrf.mxu0
    %v650 = vadd.f32 %v565, %v649
    %v651 = vpop.f32.mrf.mxu0
    %652 = vmatprep.mubr.f32.mxu0 0.0
    %653 = vmatmul.mubr.f32.gmra.mxu0 %v356
    %v654 = vpop.f32.mrf.mxu0
    %v655 = vadd.f32 %v570, %v654
    %v656 = vpop.f32.mrf.mxu0
    %657 = vdwg.mxu0
    %v659 = vsel %vm374, %v126, 0
    %v662 = vsel %vm374, %v127, 0
    %v665 = vsel %vm374, %v128, 0
    %v668 = vsel %vm374, %v129, 0
    %670 = vmatprep.subr.mxu0 0.0
    %671 = vmatpush1.msra.mxu0 0.0
    %672 = vmatprep.subr.mxu0 0.0
    %673 = vmatpush1.msra.mxu0 0.0
    %674 = vmatprep.subr.mxu0 0.0
    %675 = vmatpush1.msra.mxu0 0.0
    %676 = vmatprep.subr.mxu0 0.0
    %677 = vmatpush1.msra.mxu0 0.0
    %678 = vmatprep.subr.mxu0 0.0
    %679 = vmatpush1.msra.mxu0 0.0
    %680 = vmatprep.subr.mxu0 0.0
    %681 = vmatpush1.msra.mxu0 0.0
    %682 = vmatprep.subr.mxu0 0.0
    %683 = vmatpush1.msra.mxu0 0.0
    %684 = vmatprep.subr.mxu0 0.0
    %685 = vmatpush1.msra.mxu0 0.0
    %686 = vmatprep.subr.mxu0 0.0
    %687 = vmatpush1.msra.mxu0 0.0
    %688 = vmatprep.subr.mxu0 0.0
    %689 = vmatpush1.msra.mxu0 0.0
    %690 = vmatprep.subr.mxu0 0.0
    %691 = vmatpush1.msra.mxu0 0.0
    %692 = vmatprep.subr.mxu0 0.0
    %693 = vmatpush1.msra.mxu0 0.0
    %694 = vmatprep.subr.mxu0 0.0
    %695 = vmatpush1.msra.mxu0 %v356
    %696 = vmatprep.subr.mxu0 0.0
    %697 = vmatpush1.msra.mxu0 %v355
    %698 = vmatprep.subr.mxu0 0.0
    %699 = vmatpush1.msra.mxu0 %v354
    %700 = vmatprep.subr.mxu0 0.0
    %701 = vmatpush1.msra.mxu0 %v353
    %702 = vmatprep.subr.mxu0 0.0
    %703 = vmatpush2.msra.mxu0 0.0
    %704 = vmatprep.subr.mxu0 0.0
    %705 = vmatpush2.msra.mxu0 0.0
    %706 = vmatprep.subr.mxu0 0.0
    %707 = vmatpush2.msra.mxu0 0.0
    %708 = vmatprep.subr.mxu0 0.0
    %709 = vmatpush2.msra.mxu0 0.0
    %710 = vmatprep.subr.mxu0 0.0
    %711 = vmatpush2.msra.mxu0 0.0
    %712 = vmatprep.subr.mxu0 0.0
    %713 = vmatpush2.msra.mxu0 0.0
    %714 = vmatprep.subr.mxu0 0.0
    %715 = vmatpush2.msra.mxu0 0.0
    %716 = vmatprep.subr.mxu0 0.0
    %717 = vmatpush2.msra.mxu0 0.0
    %718 = vmatprep.subr.mxu0 0.0
    %719 = vmatpush2.msra.mxu0 0.0
    %720 = vmatprep.subr.mxu0 0.0
    %721 = vmatpush2.msra.mxu0 0.0
    %722 = vmatprep.subr.mxu0 0.0
    %723 = vmatpush2.msra.mxu0 0.0
    %724 = vmatprep.subr.mxu0 0.0
    %725 = vmatpush2.msra.mxu0 0.0
    %726 = vmatprep.subr.mxu0 0.0
    %727 = vmatpush2.msra.mxu0 0.0
    %728 = vmatprep.subr.mxu0 0.0
    %729 = vmatpush2.msra.mxu0 0.0
    %730 = vmatprep.subr.mxu0 0.0
    %731 = vmatpush2.msra.mxu0 0.0
    %732 = vmatprep.subr.mxu0 0.0
    %733 = vmatpush2.msra.mxu0 0.0
    %734 = vmatprep.mubr.f32.mxu0 0.0
    %735 = vmatmul.mubr.f32.gmra.mxu0 %v659
    %v736 = vpop.f32.mrf.mxu0
    %v737 = vadd.f32 0.0, %v736
    %v738 = vpop.f32.mrf.mxu0
    %739 = vmatprep.mubr.f32.mxu0 0.0
    %740 = vmatmul.mubr.f32.gmra.mxu0 %v662
    %v741 = vpop.f32.mrf.mxu0
    %v742 = vadd.f32 0.0, %v741
    %v743 = vpop.f32.mrf.mxu0
    %744 = vmatprep.mubr.f32.mxu0 0.0
    %745 = vmatmul.mubr.f32.gmra.mxu0 %v665
    %v746 = vpop.f32.mrf.mxu0
    %v747 = vadd.f32 0.0, %v746
    %v748 = vpop.f32.mrf.mxu0
    %749 = vmatprep.mubr.f32.mxu0 0.0
    %750 = vmatmul.mubr.f32.gmra.mxu0 %v668
    %v751 = vpop.f32.mrf.mxu0
    %v752 = vadd.f32 0.0, %v751
    %v753 = vpop.f32.mrf.mxu0
    %754 = vdwg.mxu0
    %s755 = scalar_lea.vmem [#allocation8], 256
    %v756 = vld [vmem:[%s755] sm:$0xff]
    %v757 = vld [vmem:[%s755 + $0x8] sm:$0xff]
    %v758 = vld [vmem:[%s755 + $0x10] sm:$0xff]
    %v759 = vld [vmem:[%s755 + $0x18] sm:$0xff]
    %v760 = vld [vmem:[%s755 + $0x20] sm:$0xff]
    %v761 = vld [vmem:[%s755 + $0x28] sm:$0xff]
    %v762 = vld [vmem:[%s755 + $0x30] sm:$0xff]
    %v763 = vld [vmem:[%s755 + $0x38] sm:$0xff]
    %v764 = vld [vmem:[%s755 + $0x40] sm:$0xff]
    %v765 = vld [vmem:[%s755 + $0x48] sm:$0xff]
    %v766 = vld [vmem:[%s755 + $0x50] sm:$0xff]
    %v767 = vld [vmem:[%s755 + $0x58] sm:$0xff]
    %v768 = vld [vmem:[%s755 + $0x60] sm:$0xff]
    %v769 = vld [vmem:[%s755 + $0x68] sm:$0xff]
    %v770 = vld [vmem:[%s755 + $0x70] sm:$0xff]
    %v771 = vld [vmem:[%s755 + $0x78] sm:$0xff]
    %772 = vmatprep.subr.mxu0 0.0
    %773 = vmatpush1.msra.mxu0 %v771
    %774 = vmatprep.subr.mxu0 0.0
    %775 = vmatpush1.msra.mxu0 %v770
    %776 = vmatprep.subr.mxu0 0.0
    %777 = vmatpush1.msra.mxu0 %v769
    %778 = vmatprep.subr.mxu0 0.0
    %779 = vmatpush1.msra.mxu0 %v768
    %780 = vmatprep.subr.mxu0 0.0
    %781 = vmatpush1.msra.mxu0 %v767
    %782 = vmatprep.subr.mxu0 0.0
    %783 = vmatpush1.msra.mxu0 %v766
    %784 = vmatprep.subr.mxu0 0.0
    %785 = vmatpush1.msra.mxu0 %v765
    %786 = vmatprep.subr.mxu0 0.0
    %787 = vmatpush1.msra.mxu0 %v764
    %788 = vmatprep.subr.mxu0 0.0
    %789 = vmatpush1.msra.mxu0 %v763
    %790 = vmatprep.subr.mxu0 0.0
    %791 = vmatpush1.msra.mxu0 %v762
    %792 = vmatprep.subr.mxu0 0.0
    %793 = vmatpush1.msra.mxu0 %v761
    %794 = vmatprep.subr.mxu0 0.0
    %795 = vmatpush1.msra.mxu0 %v760
    %796 = vmatprep.subr.mxu0 0.0
    %797 = vmatpush1.msra.mxu0 %v759
    %798 = vmatprep.subr.mxu0 0.0
    %799 = vmatpush1.msra.mxu0 %v758
    %800 = vmatprep.subr.mxu0 0.0
    %801 = vmatpush1.msra.mxu0 %v757
    %802 = vmatprep.subr.mxu0 0.0
    %803 = vmatpush1.msra.mxu0 %v756
    %804 = vmatprep.subr.mxu0 0.0
    %805 = vmatpush2.msra.mxu0 0.0
    %806 = vmatprep.subr.mxu0 0.0
    %807 = vmatpush2.msra.mxu0 0.0
    %808 = vmatprep.subr.mxu0 0.0
    %809 = vmatpush2.msra.mxu0 0.0
    %810 = vmatprep.subr.mxu0 0.0
    %811 = vmatpush2.msra.mxu0 0.0
    %812 = vmatprep.subr.mxu0 0.0
    %813 = vmatpush2.msra.mxu0 0.0
    %814 = vmatprep.subr.mxu0 0.0
    %815 = vmatpush2.msra.mxu0 0.0
    %816 = vmatprep.subr.mxu0 0.0
    %817 = vmatpush2.msra.mxu0 0.0
    %818 = vmatprep.subr.mxu0 0.0
    %819 = vmatpush2.msra.mxu0 0.0
    %820 = vmatprep.subr.mxu0 0.0
    %821 = vmatpush2.msra.mxu0 0.0
    %822 = vmatprep.subr.mxu0 0.0
    %823 = vmatpush2.msra.mxu0 0.0
    %824 = vmatprep.subr.mxu0 0.0
    %825 = vmatpush2.msra.mxu0 0.0
    %826 = vmatprep.subr.mxu0 0.0
    %827 = vmatpush2.msra.mxu0 0.0
    %828 = vmatprep.subr.mxu0 0.0
    %829 = vmatpush2.msra.mxu0 0.0
    %830 = vmatprep.subr.mxu0 0.0
    %831 = vmatpush2.msra.mxu0 0.0
    %832 = vmatprep.subr.mxu0 0.0
    %833 = vmatpush2.msra.mxu0 0.0
    %834 = vmatprep.subr.mxu0 0.0
    %835 = vmatpush2.msra.mxu0 0.0
    %836 = vmatprep.mubr.f32.mxu0 0.0
    %837 = vmatmul.mubr.f32.gmra.mxu0 %v737
    %v838 = vpop.f32.mrf.mxu0
    %v839 = vadd.f32 0.0, %v838
    %v840 = vpop.f32.mrf.mxu0
    %841 = vmatprep.mubr.f32.mxu0 0.0
    %842 = vmatmul.mubr.f32.gmra.mxu0 %v742
    %v843 = vpop.f32.mrf.mxu0
    %v844 = vadd.f32 0.0, %v843
    %v845 = vpop.f32.mrf.mxu0
    %846 = vmatprep.mubr.f32.mxu0 0.0
    %847 = vmatmul.mubr.f32.gmra.mxu0 %v747
    %v848 = vpop.f32.mrf.mxu0
    %v849 = vadd.f32 0.0, %v848
    %v850 = vpop.f32.mrf.mxu0
    %851 = vmatprep.mubr.f32.mxu0 0.0
    %852 = vmatmul.mubr.f32.gmra.mxu0 %v752
    %v853 = vpop.f32.mrf.mxu0
    %v854 = vadd.f32 0.0, %v853
    %v855 = vpop.f32.mrf.mxu0
    %856 = vdwg.mxu0
    %v857 = vadd.f32 %v640, %v839
    %v858 = vadd.f32 %v645, %v844
    %v859 = vadd.f32 %v650, %v849
    %v860 = vadd.f32 %v655, %v854
    %v861 = vld [vmem:[%s7] sm:$0x1]
    %v862 = vld [vmem:[%s8] sm:$0x1]
    %863 = vmatprep.subr.mxu0 0.0
    %864 = vmatpush1.msra.mxu0 %v120
    %865 = vmatprep.subr.mxu0 0.0
    %866 = vmatpush1.msra.mxu0 %v119
    %867 = vmatprep.subr.mxu0 0.0
    %868 = vmatpush1.msra.mxu0 %v118
    %869 = vmatprep.subr.mxu0 0.0
    %870 = vmatpush1.msra.mxu0 %v117
    %871 = vmatprep.subr.mxu0 0.0
    %872 = vmatpush1.msra.mxu0 %v116
    %873 = vmatprep.subr.mxu0 0.0
    %874 = vmatpush1.msra.mxu0 %v115
    %875 = vmatprep.subr.mxu0 0.0
    %876 = vmatpush1.msra.mxu0 %v114
    %877 = vmatprep.subr.mxu0 0.0
    %878 = vmatpush1.msra.mxu0 %v113
    %879 = vmatprep.subr.mxu0 0.0
    %880 = vmatpush1.msra.mxu0 %v112
    %881 = vmatprep.subr.mxu0 0.0
    %882 = vmatpush1.msra.mxu0 %v111
    %883 = vmatprep.subr.mxu0 0.0
    %884 = vmatpush1.msra.mxu0 %v110
    %885 = vmatprep.subr.mxu0 0.0
    %886 = vmatpush1.msra.mxu0 %v109
    %887 = vmatprep.subr.mxu0 0.0
    %888 = vmatpush1.msra.mxu0 %v108
    %889 = vmatprep.subr.mxu0 0.0
    %890 = vmatpush1.msra.mxu0 %v107
    %891 = vmatprep.subr.mxu0 0.0
    %892 = vmatpush1.msra.mxu0 %v106
    %893 = vmatprep.subr.mxu0 0.0
    %894 = vmatpush1.msra.mxu0 %v105
    %895 = vmatprep.subr.mxu0 0.0
    %896 = vmatpush2.msra.mxu0 0.0
    %897 = vmatprep.subr.mxu0 0.0
    %898 = vmatpush2.msra.mxu0 0.0
    %899 = vmatprep.subr.mxu0 0.0
    %900 = vmatpush2.msra.mxu0 0.0
    %901 = vmatprep.subr.mxu0 0.0
    %902 = vmatpush2.msra.mxu0 0.0
    %903 = vmatprep.subr.mxu0 0.0
    %904 = vmatpush2.msra.mxu0 0.0
    %905 = vmatprep.subr.mxu0 0.0
    %906 = vmatpush2.msra.mxu0 0.0
    %907 = vmatprep.subr.mxu0 0.0
    %908 = vmatpush2.msra.mxu0 0.0
    %909 = vmatprep.subr.mxu0 0.0
    %910 = vmatpush2.msra.mxu0 0.0
    %911 = vmatprep.subr.mxu0 0.0
    %912 = vmatpush2.msra.mxu0 0.0
    %913 = vmatprep.subr.mxu0 0.0
    %914 = vmatpush2.msra.mxu0 0.0
    %915 = vmatprep.subr.mxu0 0.0
    %916 = vmatpush2.msra.mxu0 0.0
    %917 = vmatprep.subr.mxu0 0.0
    %918 = vmatpush2.msra.mxu0 0.0
    %919 = vmatprep.subr.mxu0 0.0
    %920 = vmatpush2.msra.mxu0 0.0
    %921 = vmatprep.subr.mxu0 0.0
    %922 = vmatpush2.msra.mxu0 0.0
    %923 = vmatprep.subr.mxu0 0.0
    %924 = vmatpush2.msra.mxu0 0.0
    %925 = vmatprep.subr.mxu0 0.0
    %926 = vmatpush2.msra.mxu0 0.0
    %927 = vmatprep.mubr.f32.mxu0 0.0
    %928 = vmatmul.mubr.f32.gmra.mxu0 %v857
    %v929 = vpop.f32.mrf.mxu0
    %v930 = vadd.f32 0.0, %v929
    %v931 = vpop.f32.mrf.mxu0
    %932 = vmatprep.mubr.f32.mxu0 0.0
    %933 = vmatmul.mubr.f32.gmra.mxu0 %v858
    %v934 = vpop.f32.mrf.mxu0
    %v935 = vadd.f32 0.0, %v934
    %v936 = vpop.f32.mrf.mxu0
    %937 = vmatprep.mubr.f32.mxu0 0.0
    %938 = vmatmul.mubr.f32.gmra.mxu0 %v859
    %v939 = vpop.f32.mrf.mxu0
    %v940 = vadd.f32 0.0, %v939
    %v941 = vpop.f32.mrf.mxu0
    %942 = vmatprep.mubr.f32.mxu0 0.0
    %943 = vmatmul.mubr.f32.gmra.mxu0 %v860
    %v944 = vpop.f32.mrf.mxu0
    %v945 = vadd.f32 0.0, %v944
    %v946 = vpop.f32.mrf.mxu0
    %947 = vdwg.mxu0
    %v948 = vadd.f32 %v930, %v935
    %v949 = vadd.f32 %v948, %v940
    %v950 = vadd.f32 %v949, %v945
    %v951 = vrot.slane %v950, 4
    %v952 = vadd.f32 %v950, %v951
    %v953 = vrot.slane %v952, 2
    %v954 = vadd.f32 %v952, %v953
    %v955 = vrot.slane %v954, 1
    %v956 = vadd.f32 %v954, %v955
    %v957 = vmul.f32 %v956, 0.001953125
    %v958 = vmul.f32 %v857, %v857
    %v959 = vmul.f32 %v858, %v858
    %v960 = vmul.f32 %v859, %v859
    %v961 = vmul.f32 %v860, %v860
    %962 = vmatprep.subr.mxu0 0.0
    %963 = vmatpush1.msra.mxu0 %v120
    %964 = vmatprep.subr.mxu0 0.0
    %965 = vmatpush1.msra.mxu0 %v119
    %966 = vmatprep.subr.mxu0 0.0
    %967 = vmatpush1.msra.mxu0 %v118
    %968 = vmatprep.subr.mxu0 0.0
    %969 = vmatpush1.msra.mxu0 %v117
    %970 = vmatprep.subr.mxu0 0.0
    %971 = vmatpush1.msra.mxu0 %v116
    %972 = vmatprep.subr.mxu0 0.0
    %973 = vmatpush1.msra.mxu0 %v115
    %974 = vmatprep.subr.mxu0 0.0
    %975 = vmatpush1.msra.mxu0 %v114
    %976 = vmatprep.subr.mxu0 0.0
    %977 = vmatpush1.msra.mxu0 %v113
    %978 = vmatprep.subr.mxu0 0.0
    %979 = vmatpush1.msra.mxu0 %v112
    %980 = vmatprep.subr.mxu0 0.0
    %981 = vmatpush1.msra.mxu0 %v111
    %982 = vmatprep.subr.mxu0 0.0
    %983 = vmatpush1.msra.mxu0 %v110
    %984 = vmatprep.subr.mxu0 0.0
    %985 = vmatpush1.msra.mxu0 %v109
    %986 = vmatprep.subr.mxu0 0.0
    %987 = vmatpush1.msra.mxu0 %v108
    %988 = vmatprep.subr.mxu0 0.0
    %989 = vmatpush1.msra.mxu0 %v107
    %990 = vmatprep.subr.mxu0 0.0
    %991 = vmatpush1.msra.mxu0 %v106
    %992 = vmatprep.subr.mxu0 0.0
    %993 = vmatpush1.msra.mxu0 %v105
    %994 = vmatprep.subr.mxu0 0.0
    %995 = vmatpush2.msra.mxu0 0.0
    %996 = vmatprep.subr.mxu0 0.0
    %997 = vmatpush2.msra.mxu0 0.0
    %998 = vmatprep.subr.mxu0 0.0
    %999 = vmatpush2.msra.mxu0 0.0
    %1000 = vmatprep.subr.mxu0 0.0
    %1001 = vmatpush2.msra.mxu0 0.0
    %1002 = vmatprep.subr.mxu0 0.0
    %1003 = vmatpush2.msra.mxu0 0.0
    %1004 = vmatprep.subr.mxu0 0.0
    %1005 = vmatpush2.msra.mxu0 0.0
    %1006 = vmatprep.subr.mxu0 0.0
    %1007 = vmatpush2.msra.mxu0 0.0
    %1008 = vmatprep.subr.mxu0 0.0
    %1009 = vmatpush2.msra.mxu0 0.0
    %1010 = vmatprep.subr.mxu0 0.0
    %1011 = vmatpush2.msra.mxu0 0.0
    %1012 = vmatprep.subr.mxu0 0.0
    %1013 = vmatpush2.msra.mxu0 0.0
    %1014 = vmatprep.subr.mxu0 0.0
    %1015 = vmatpush2.msra.mxu0 0.0
    %1016 = vmatprep.subr.mxu0 0.0
    %1017 = vmatpush2.msra.mxu0 0.0
    %1018 = vmatprep.subr.mxu0 0.0
    %1019 = vmatpush2.msra.mxu0 0.0
    %1020 = vmatprep.subr.mxu0 0.0
    %1021 = vmatpush2.msra.mxu0 0.0
    %1022 = vmatprep.subr.mxu0 0.0
    %1023 = vmatpush2.msra.mxu0 0.0
    %1024 = vmatprep.subr.mxu0 0.0
    %1025 = vmatpush2.msra.mxu0 0.0
    %1026 = vmatprep.mubr.f32.mxu0 0.0
    %1027 = vmatmul.mubr.f32.gmra.mxu0 %v958
    %v1028 = vpop.f32.mrf.mxu0
    %v1029 = vadd.f32 0.0, %v1028
    %v1030 = vpop.f32.mrf.mxu0
    %1031 = vmatprep.mubr.f32.mxu0 0.0
    %1032 = vmatmul.mubr.f32.gmra.mxu0 %v959
    %v1033 = vpop.f32.mrf.mxu0
    %v1034 = vadd.f32 0.0, %v1033
    %v1035 = vpop.f32.mrf.mxu0
    %1036 = vmatprep.mubr.f32.mxu0 0.0
    %1037 = vmatmul.mubr.f32.gmra.mxu0 %v960
    %v1038 = vpop.f32.mrf.mxu0
    %v1039 = vadd.f32 0.0, %v1038
    %v1040 = vpop.f32.mrf.mxu0
    %1041 = vmatprep.mubr.f32.mxu0 0.0
    %1042 = vmatmul.mubr.f32.gmra.mxu0 %v961
    %v1043 = vpop.f32.mrf.mxu0
    %v1044 = vadd.f32 0.0, %v1043
    %v1045 = vpop.f32.mrf.mxu0
    %1046 = vdwg.mxu0
    %v1047 = vadd.f32 %v1029, %v1034
    %v1048 = vadd.f32 %v1047, %v1039
    %v1049 = vadd.f32 %v1048, %v1044
    %v1050 = vrot.slane %v1049, 4
    %v1051 = vadd.f32 %v1049, %v1050
    %v1052 = vrot.slane %v1051, 2
    %v1053 = vadd.f32 %v1051, %v1052
    %v1054 = vrot.slane %v1053, 1
    %v1055 = vadd.f32 %v1053, %v1054
    %v1056 = vmul.f32 %v1055, 0.001953125
    %v1057 = vmul.f32 %v957, %v957
    %v1058 = vsub.f32 %v1056, %v1057
    %v1059 = vadd.f32 %v1058, 1e-05
    %v1060 = vrsqrt.pop %v1059
    %v1061 = vmul.f32 %v861, %v1060
    %v1062 = vmul.f32 %v957, %v1061
    %v1063 = vsub.f32 %v862, %v1062
    %v1065 = vlaneseq
    %v1066 = vshrl.u32 %v1065, 7
    %v1067 = vsub.s32 0, %v1066
    %v1068 = vrot.slane %v1061, %v1067
    %v1070 = vmul.f32 %v857, %v1068
    %v1071 = vmul.f32 %v858, %v1068
    %v1072 = vmul.f32 %v859, %v1068
    %v1073 = vmul.f32 %v860, %v1068
    %v1075 = vlaneseq
    %v1076 = vshrl.u32 %v1075, 7
    %v1077 = vsub.s32 0, %v1076
    %v1078 = vrot.slane %v1063, %v1077
    %v1080 = vadd.f32 %v1070, %v1078
    %v1081 = vadd.f32 %v1071, %v1078
    %v1082 = vadd.f32 %v1072, %v1078
    %v1083 = vadd.f32 %v1073, %v1078
    %v1084 = vmax.f32 %v1080, 0.0
    %v1085 = vmax.f32 %v1081, 0.0
    %v1086 = vmax.f32 %v1082, 0.0
    %v1087 = vmax.f32 %v1083, 0.0
    %s1088 = scalar_lea.vmem [#allocation10], 128
    %v1089 = vld [vmem:[%s1088] sm:$0xff]
    %v1090 = vld [vmem:[%s1088 + $0x8] sm:$0xff]
    %v1091 = vld [vmem:[%s1088 + $0x10] sm:$0xff]
    %v1092 = vld [vmem:[%s1088 + $0x18] sm:$0xff]
    %v1093 = vld [vmem:[%s1088 + $0x20] sm:$0xff]
    %v1094 = vld [vmem:[%s1088 + $0x28] sm:$0xff]
    %v1095 = vld [vmem:[%s1088 + $0x30] sm:$0xff]
    %v1096 = vld [vmem:[%s1088 + $0x38] sm:$0xff]
    %v1097 = vld [vmem:[%s1088 + $0x40] sm:$0xff]
    %v1098 = vld [vmem:[%s1088 + $0x48] sm:$0xff]
    %v1099 = vld [vmem:[%s1088 + $0x50] sm:$0xff]
    %v1100 = vld [vmem:[%s1088 + $0x58] sm:$0xff]
    %v1101 = vld [vmem:[%s1088 + $0x60] sm:$0xff]
    %v1102 = vld [vmem:[%s1088 + $0x68] sm:$0xff]
    %v1103 = vld [vmem:[%s1088 + $0x70] sm:$0xff]
    %v1104 = vld [vmem:[%s1088 + $0x78] sm:$0xff]
    %1105 = vmatprep.subr.mxu0 0.0
    %1106 = vmatpush1.msra.mxu0 0.0
    %1107 = vmatprep.subr.mxu0 0.0
    %1108 = vmatpush1.msra.mxu0 0.0
    %1109 = vmatprep.subr.mxu0 0.0
    %1110 = vmatpush1.msra.mxu0 0.0
    %1111 = vmatprep.subr.mxu0 0.0
    %1112 = vmatpush1.msra.mxu0 0.0
    %1113 = vmatprep.subr.mxu0 0.0
    %1114 = vmatpush1.msra.mxu0 0.0
    %1115 = vmatprep.subr.mxu0 0.0
    %1116 = vmatpush1.msra.mxu0 0.0
    %1117 = vmatprep.subr.mxu0 0.0
    %1118 = vmatpush1.msra.mxu0 0.0
    %1119 = vmatprep.subr.mxu0 0.0
    %1120 = vmatpush1.msra.mxu0 0.0
    %1121 = vmatprep.subr.mxu0 0.0
    %1122 = vmatpush1.msra.mxu0 0.0
    %1123 = vmatprep.subr.mxu0 0.0
    %1124 = vmatpush1.msra.mxu0 0.0
    %1125 = vmatprep.subr.mxu0 0.0
    %1126 = vmatpush1.msra.mxu0 0.0
    %1127 = vmatprep.subr.mxu0 0.0
    %1128 = vmatpush1.msra.mxu0 0.0
    %1129 = vmatprep.subr.mxu0 0.0
    %1130 = vmatpush1.msra.mxu0 %v1087
    %1131 = vmatprep.subr.mxu0 0.0
    %1132 = vmatpush1.msra.mxu0 %v1086
    %1133 = vmatprep.subr.mxu0 0.0
    %1134 = vmatpush1.msra.mxu0 %v1085
    %1135 = vmatprep.subr.mxu0 0.0
    %1136 = vmatpush1.msra.mxu0 %v1084
    %1137 = vmatprep.subr.mxu0 0.0
    %1138 = vmatpush2.msra.mxu0 0.0
    %1139 = vmatprep.subr.mxu0 0.0
    %1140 = vmatpush2.msra.mxu0 0.0
    %1141 = vmatprep.subr.mxu0 0.0
    %1142 = vmatpush2.msra.mxu0 0.0
    %1143 = vmatprep.subr.mxu0 0.0
    %1144 = vmatpush2.msra.mxu0 0.0
    %1145 = vmatprep.subr.mxu0 0.0
    %1146 = vmatpush2.msra.mxu0 0.0
    %1147 = vmatprep.subr.mxu0 0.0
    %1148 = vmatpush2.msra.mxu0 0.0
    %1149 = vmatprep.subr.mxu0 0.0
    %1150 = vmatpush2.msra.mxu0 0.0
    %1151 = vmatprep.subr.mxu0 0.0
    %1152 = vmatpush2.msra.mxu0 0.0
    %1153 = vmatprep.subr.mxu0 0.0
    %1154 = vmatpush2.msra.mxu0 0.0
    %1155 = vmatprep.subr.mxu0 0.0
    %1156 = vmatpush2.msra.mxu0 0.0
    %1157 = vmatprep.subr.mxu0 0.0
    %1158 = vmatpush2.msra.mxu0 0.0
    %1159 = vmatprep.subr.mxu0 0.0
    %1160 = vmatpush2.msra.mxu0 0.0
    %1161 = vmatprep.subr.mxu0 0.0
    %1162 = vmatpush2.msra.mxu0 0.0
    %1163 = vmatprep.subr.mxu0 0.0
    %1164 = vmatpush2.msra.mxu0 0.0
    %1165 = vmatprep.subr.mxu0 0.0
    %1166 = vmatpush2.msra.mxu0 0.0
    %1167 = vmatprep.subr.mxu0 0.0
    %1168 = vmatpush2.msra.mxu0 0.0
    %1169 = vmatprep.mubr.f32.mxu0 0.0
    %1170 = vmatmul.mubr.f32.gmra.mxu0 %v376
    %v1171 = vpop.f32.mrf.mxu0
    %v1172 = vadd.f32 0.0, %v1171
    %v1173 = vpop.f32.mrf.mxu0
    %1174 = vmatprep.mubr.f32.mxu0 0.0
    %1175 = vmatmul.mubr.f32.gmra.mxu0 %v379
    %v1176 = vpop.f32.mrf.mxu0
    %v1177 = vadd.f32 0.0, %v1176
    %v1178 = vpop.f32.mrf.mxu0
    %1179 = vmatprep.mubr.f32.mxu0 0.0
    %1180 = vmatmul.mubr.f32.gmra.mxu0 %v382
    %v1181 = vpop.f32.mrf.mxu0
    %v1182 = vadd.f32 0.0, %v1181
    %v1183 = vpop.f32.mrf.mxu0
    %1184 = vmatprep.mubr.f32.mxu0 0.0
    %1185 = vmatmul.mubr.f32.gmra.mxu0 %v385
    %v1186 = vpop.f32.mrf.mxu0
    %v1187 = vadd.f32 0.0, %v1186
    %v1188 = vpop.f32.mrf.mxu0
    %1189 = vdwg.mxu0
    %v1190 = vld [vmem:[#allocation10] sm:$0xff]
    %v1191 = vld [vmem:[#allocation10 + $0x8] sm:$0xff]
    %v1192 = vld [vmem:[#allocation10 + $0x10] sm:$0xff]
    %v1193 = vld [vmem:[#allocation10 + $0x18] sm:$0xff]
    %v1194 = vld [vmem:[#allocation10 + $0x20] sm:$0xff]
    %v1195 = vld [vmem:[#allocation10 + $0x28] sm:$0xff]
    %v1196 = vld [vmem:[#allocation10 + $0x30] sm:$0xff]
    %v1197 = vld [vmem:[#allocation10 + $0x38] sm:$0xff]
    %v1198 = vld [vmem:[#allocation10 + $0x40] sm:$0xff]
    %v1199 = vld [vmem:[#allocation10 + $0x48] sm:$0xff]
    %v1200 = vld [vmem:[#allocation10 + $0x50] sm:$0xff]
    %v1201 = vld [vmem:[#allocation10 + $0x58] sm:$0xff]
    %v1202 = vld [vmem:[#allocation10 + $0x60] sm:$0xff]
    %v1203 = vld [vmem:[#allocation10 + $0x68] sm:$0xff]
    %v1204 = vld [vmem:[#allocation10 + $0x70] sm:$0xff]
    %v1205 = vld [vmem:[#allocation10 + $0x78] sm:$0xff]
    %1206 = vmatprep.subr.mxu0 0.0
    %1207 = vmatpush1.msra.mxu0 %v1205
    %1208 = vmatprep.subr.mxu0 0.0
    %1209 = vmatpush1.msra.mxu0 %v1204
    %1210 = vmatprep.subr.mxu0 0.0
    %1211 = vmatpush1.msra.mxu0 %v1203
    %1212 = vmatprep.subr.mxu0 0.0
    %1213 = vmatpush1.msra.mxu0 %v1202
    %1214 = vmatprep.subr.mxu0 0.0
    %1215 = vmatpush1.msra.mxu0 %v1201
    %1216 = vmatprep.subr.mxu0 0.0
    %1217 = vmatpush1.msra.mxu0 %v1200
    %1218 = vmatprep.subr.mxu0 0.0
    %1219 = vmatpush1.msra.mxu0 %v1199
    %1220 = vmatprep.subr.mxu0 0.0
    %1221 = vmatpush1.msra.mxu0 %v1198
    %1222 = vmatprep.subr.mxu0 0.0
    %1223 = vmatpush1.msra.mxu0 %v1197
    %1224 = vmatprep.subr.mxu0 0.0
    %1225 = vmatpush1.msra.mxu0 %v1196
    %1226 = vmatprep.subr.mxu0 0.0
    %1227 = vmatpush1.msra.mxu0 %v1195
    %1228 = vmatprep.subr.mxu0 0.0
    %1229 = vmatpush1.msra.mxu0 %v1194
    %1230 = vmatprep.subr.mxu0 0.0
    %1231 = vmatpush1.msra.mxu0 %v1193
    %1232 = vmatprep.subr.mxu0 0.0
    %1233 = vmatpush1.msra.mxu0 %v1192
    %1234 = vmatprep.subr.mxu0 0.0
    %1235 = vmatpush1.msra.mxu0 %v1191
    %1236 = vmatprep.subr.mxu0 0.0
    %1237 = vmatpush1.msra.mxu0 %v1190
    %1238 = vmatprep.subr.mxu0 0.0
    %1239 = vmatpush2.msra.mxu0 0.0
    %1240 = vmatprep.subr.mxu0 0.0
    %1241 = vmatpush2.msra.mxu0 0.0
    %1242 = vmatprep.subr.mxu0 0.0
    %1243 = vmatpush2.msra.mxu0 0.0
    %1244 = vmatprep.subr.mxu0 0.0
    %1245 = vmatpush2.msra.mxu0 0.0
    %1246 = vmatprep.subr.mxu0 0.0
    %1247 = vmatpush2.msra.mxu0 0.0
    %1248 = vmatprep.subr.mxu0 0.0
    %1249 = vmatpush2.msra.mxu0 0.0
    %1250 = vmatprep.subr.mxu0 0.0
    %1251 = vmatpush2.msra.mxu0 0.0
    %1252 = vmatprep.subr.mxu0 0.0
    %1253 = vmatpush2.msra.mxu0 0.0
    %1254 = vmatprep.subr.mxu0 0.0
    %1255 = vmatpush2.msra.mxu0 0.0
    %1256 = vmatprep.subr.mxu0 0.0
    %1257 = vmatpush2.msra.mxu0 0.0
    %1258 = vmatprep.subr.mxu0 0.0
    %1259 = vmatpush2.msra.mxu0 0.0
    %1260 = vmatprep.subr.mxu0 0.0
    %1261 = vmatpush2.msra.mxu0 0.0
    %1262 = vmatprep.subr.mxu0 0.0
    %1263 = vmatpush2.msra.mxu0 0.0
    %1264 = vmatprep.subr.mxu0 0.0
    %1265 = vmatpush2.msra.mxu0 0.0
    %1266 = vmatprep.subr.mxu0 0.0
    %1267 = vmatpush2.msra.mxu0 0.0
    %1268 = vmatprep.subr.mxu0 0.0
    %1269 = vmatpush2.msra.mxu0 0.0
    %1270 = vmatprep.mubr.f32.mxu0 0.0
    %1271 = vmatmul.mubr.f32.gmra.mxu0 %v1172
    %v1272 = vpop.f32.mrf.mxu0
    %v1273 = vadd.f32 0.0, %v1272
    %v1274 = vpop.f32.mrf.mxu0
    %1275 = vmatprep.mubr.f32.mxu0 0.0
    %1276 = vmatmul.mubr.f32.gmra.mxu0 %v1177
    %v1277 = vpop.f32.mrf.mxu0
    %v1278 = vadd.f32 0.0, %v1277
    %v1279 = vpop.f32.mrf.mxu0
    %1280 = vmatprep.mubr.f32.mxu0 0.0
    %1281 = vmatmul.mubr.f32.gmra.mxu0 %v1182
    %v1282 = vpop.f32.mrf.mxu0
    %v1283 = vadd.f32 0.0, %v1282
    %v1284 = vpop.f32.mrf.mxu0
    %1285 = vmatprep.mubr.f32.mxu0 0.0
    %1286 = vmatmul.mubr.f32.gmra.mxu0 %v1187
    %v1287 = vpop.f32.mrf.mxu0
    %v1288 = vadd.f32 0.0, %v1287
    %v1289 = vpop.f32.mrf.mxu0
    %1290 = vdwg.mxu0
    %1291 = vmatprep.subr.mxu0 0.0
    %1292 = vmatpush1.msra.mxu0 %v1104
    %1293 = vmatprep.subr.mxu0 0.0
    %1294 = vmatpush1.msra.mxu0 %v1103
    %1295 = vmatprep.subr.mxu0 0.0
    %1296 = vmatpush1.msra.mxu0 %v1102
    %1297 = vmatprep.subr.mxu0 0.0
    %1298 = vmatpush1.msra.mxu0 %v1101
    %1299 = vmatprep.subr.mxu0 0.0
    %1300 = vmatpush1.msra.mxu0 %v1100
    %1301 = vmatprep.subr.mxu0 0.0
    %1302 = vmatpush1.msra.mxu0 %v1099
    %1303 = vmatprep.subr.mxu0 0.0
    %1304 = vmatpush1.msra.mxu0 %v1098
    %1305 = vmatprep.subr.mxu0 0.0
    %1306 = vmatpush1.msra.mxu0 %v1097
    %1307 = vmatprep.subr.mxu0 0.0
    %1308 = vmatpush1.msra.mxu0 %v1096
    %1309 = vmatprep.subr.mxu0 0.0
    %1310 = vmatpush1.msra.mxu0 %v1095
    %1311 = vmatprep.subr.mxu0 0.0
    %1312 = vmatpush1.msra.mxu0 %v1094
    %1313 = vmatprep.subr.mxu0 0.0
    %1314 = vmatpush1.msra.mxu0 %v1093
    %1315 = vmatprep.subr.mxu0 0.0
    %1316 = vmatpush1.msra.mxu0 %v1092
    %1317 = vmatprep.subr.mxu0 0.0
    %1318 = vmatpush1.msra.mxu0 %v1091
    %1319 = vmatprep.subr.mxu0 0.0
    %1320 = vmatpush1.msra.mxu0 %v1090
    %1321 = vmatprep.subr.mxu0 0.0
    %1322 = vmatpush1.msra.mxu0 %v1089
    %1323 = vmatprep.subr.mxu0 0.0
    %1324 = vmatpush2.msra.mxu0 0.0
    %1325 = vmatprep.subr.mxu0 0.0
    %1326 = vmatpush2.msra.mxu0 0.0
    %1327 = vmatprep.subr.mxu0 0.0
    %1328 = vmatpush2.msra.mxu0 0.0
    %1329 = vmatprep.subr.mxu0 0.0
    %1330 = vmatpush2.msra.mxu0 0.0
    %1331 = vmatprep.subr.mxu0 0.0
    %1332 = vmatpush2.msra.mxu0 0.0
    %1333 = vmatprep.subr.mxu0 0.0
    %1334 = vmatpush2.msra.mxu0 0.0
    %1335 = vmatprep.subr.mxu0 0.0
    %1336 = vmatpush2.msra.mxu0 0.0
    %1337 = vmatprep.subr.mxu0 0.0
    %1338 = vmatpush2.msra.mxu0 0.0
    %1339 = vmatprep.subr.mxu0 0.0
    %1340 = vmatpush2.msra.mxu0 0.0
    %1341 = vmatprep.subr.mxu0 0.0
    %1342 = vmatpush2.msra.mxu0 0.0
    %1343 = vmatprep.subr.mxu0 0.0
    %1344 = vmatpush2.msra.mxu0 0.0
    %1345 = vmatprep.subr.mxu0 0.0
    %1346 = vmatpush2.msra.mxu0 0.0
    %1347 = vmatprep.subr.mxu0 0.0
    %1348 = vmatpush2.msra.mxu0 0.0
    %1349 = vmatprep.subr.mxu0 0.0
    %1350 = vmatpush2.msra.mxu0 0.0
    %1351 = vmatprep.subr.mxu0 0.0
    %1352 = vmatpush2.msra.mxu0 0.0
    %1353 = vmatprep.subr.mxu0 0.0
    %1354 = vmatpush2.msra.mxu0 0.0
    %1355 = vmatprep.mubr.f32.mxu0 0.0
    %1356 = vmatmul.mubr.f32.gmra.mxu0 %v1084
    %v1357 = vpop.f32.mrf.mxu0
    %v1358 = vadd.f32 %v1273, %v1357
    %v1359 = vpop.f32.mrf.mxu0
    %1360 = vmatprep.mubr.f32.mxu0 0.0
    %1361 = vmatmul.mubr.f32.gmra.mxu0 %v1085
    %v1362 = vpop.f32.mrf.mxu0
    %v1363 = vadd.f32 %v1278, %v1362
    %v1364 = vpop.f32.mrf.mxu0
    %1365 = vmatprep.mubr.f32.mxu0 0.0
    %1366 = vmatmul.mubr.f32.gmra.mxu0 %v1086
    %v1367 = vpop.f32.mrf.mxu0
    %v1368 = vadd.f32 %v1283, %v1367
    %v1369 = vpop.f32.mrf.mxu0
    %1370 = vmatprep.mubr.f32.mxu0 0.0
    %1371 = vmatmul.mubr.f32.gmra.mxu0 %v1087
    %v1372 = vpop.f32.mrf.mxu0
    %v1373 = vadd.f32 %v1288, %v1372
    %v1374 = vpop.f32.mrf.mxu0
    %1375 = vdwg.mxu0
    %1376 = vmatprep.subr.mxu0 0.0
    %1377 = vmatpush1.msra.mxu0 0.0
    %1378 = vmatprep.subr.mxu0 0.0
    %1379 = vmatpush1.msra.mxu0 0.0
    %1380 = vmatprep.subr.mxu0 0.0
    %1381 = vmatpush1.msra.mxu0 0.0
    %1382 = vmatprep.subr.mxu0 0.0
    %1383 = vmatpush1.msra.mxu0 0.0
    %1384 = vmatprep.subr.mxu0 0.0
    %1385 = vmatpush1.msra.mxu0 0.0
    %1386 = vmatprep.subr.mxu0 0.0
    %1387 = vmatpush1.msra.mxu0 0.0
    %1388 = vmatprep.subr.mxu0 0.0
    %1389 = vmatpush1.msra.mxu0 0.0
    %1390 = vmatprep.subr.mxu0 0.0
    %1391 = vmatpush1.msra.mxu0 0.0
    %1392 = vmatprep.subr.mxu0 0.0
    %1393 = vmatpush1.msra.mxu0 0.0
    %1394 = vmatprep.subr.mxu0 0.0
    %1395 = vmatpush1.msra.mxu0 0.0
    %1396 = vmatprep.subr.mxu0 0.0
    %1397 = vmatpush1.msra.mxu0 0.0
    %1398 = vmatprep.subr.mxu0 0.0
    %1399 = vmatpush1.msra.mxu0 0.0
    %1400 = vmatprep.subr.mxu0 0.0
    %1401 = vmatpush1.msra.mxu0 %v1087
    %1402 = vmatprep.subr.mxu0 0.0
    %1403 = vmatpush1.msra.mxu0 %v1086
    %1404 = vmatprep.subr.mxu0 0.0
    %1405 = vmatpush1.msra.mxu0 %v1085
    %1406 = vmatprep.subr.mxu0 0.0
    %1407 = vmatpush1.msra.mxu0 %v1084
    %1408 = vmatprep.subr.mxu0 0.0
    %1409 = vmatpush2.msra.mxu0 0.0
    %1410 = vmatprep.subr.mxu0 0.0
    %1411 = vmatpush2.msra.mxu0 0.0
    %1412 = vmatprep.subr.mxu0 0.0
    %1413 = vmatpush2.msra.mxu0 0.0
    %1414 = vmatprep.subr.mxu0 0.0
    %1415 = vmatpush2.msra.mxu0 0.0
    %1416 = vmatprep.subr.mxu0 0.0
    %1417 = vmatpush2.msra.mxu0 0.0
    %1418 = vmatprep.subr.mxu0 0.0
    %1419 = vmatpush2.msra.mxu0 0.0
    %1420 = vmatprep.subr.mxu0 0.0
    %1421 = vmatpush2.msra.mxu0 0.0
    %1422 = vmatprep.subr.mxu0 0.0
    %1423 = vmatpush2.msra.mxu0 0.0
    %1424 = vmatprep.subr.mxu0 0.0
    %1425 = vmatpush2.msra.mxu0 0.0
    %1426 = vmatprep.subr.mxu0 0.0
    %1427 = vmatpush2.msra.mxu0 0.0
    %1428 = vmatprep.subr.mxu0 0.0
    %1429 = vmatpush2.msra.mxu0 0.0
    %1430 = vmatprep.subr.mxu0 0.0
    %1431 = vmatpush2.msra.mxu0 0.0
    %1432 = vmatprep.subr.mxu0 0.0
    %1433 = vmatpush2.msra.mxu0 0.0
    %1434 = vmatprep.subr.mxu0 0.0
    %1435 = vmatpush2.msra.mxu0 0.0
    %1436 = vmatprep.subr.mxu0 0.0
    %1437 = vmatpush2.msra.mxu0 0.0
    %1438 = vmatprep.subr.mxu0 0.0
    %1439 = vmatpush2.msra.mxu0 0.0
    %1440 = vmatprep.mubr.f32.mxu0 0.0
    %1441 = vmatmul.mubr.f32.gmra.mxu0 %v659
    %v1442 = vpop.f32.mrf.mxu0
    %v1443 = vadd.f32 0.0, %v1442
    %v1444 = vpop.f32.mrf.mxu0
    %1445 = vmatprep.mubr.f32.mxu0 0.0
    %1446 = vmatmul.mubr.f32.gmra.mxu0 %v662
    %v1447 = vpop.f32.mrf.mxu0
    %v1448 = vadd.f32 0.0, %v1447
    %v1449 = vpop.f32.mrf.mxu0
    %1450 = vmatprep.mubr.f32.mxu0 0.0
    %1451 = vmatmul.mubr.f32.gmra.mxu0 %v665
    %v1452 = vpop.f32.mrf.mxu0
    %v1453 = vadd.f32 0.0, %v1452
    %v1454 = vpop.f32.mrf.mxu0
    %1455 = vmatprep.mubr.f32.mxu0 0.0
    %1456 = vmatmul.mubr.f32.gmra.mxu0 %v668
    %v1457 = vpop.f32.mrf.mxu0
    %v1458 = vadd.f32 0.0, %v1457
    %v1459 = vpop.f32.mrf.mxu0
    %1460 = vdwg.mxu0
    %s1461 = scalar_lea.vmem [#allocation10], 256
    %v1462 = vld [vmem:[%s1461] sm:$0xff]
    %v1463 = vld [vmem:[%s1461 + $0x8] sm:$0xff]
    %v1464 = vld [vmem:[%s1461 + $0x10] sm:$0xff]
    %v1465 = vld [vmem:[%s1461 + $0x18] sm:$0xff]
    %v1466 = vld [vmem:[%s1461 + $0x20] sm:$0xff]
    %v1467 = vld [vmem:[%s1461 + $0x28] sm:$0xff]
    %v1468 = vld [vmem:[%s1461 + $0x30] sm:$0xff]
    %v1469 = vld [vmem:[%s1461 + $0x38] sm:$0xff]
    %v1470 = vld [vmem:[%s1461 + $0x40] sm:$0xff]
    %v1471 = vld [vmem:[%s1461 + $0x48] sm:$0xff]
    %v1472 = vld [vmem:[%s1461 + $0x50] sm:$0xff]
    %v1473 = vld [vmem:[%s1461 + $0x58] sm:$0xff]
    %v1474 = vld [vmem:[%s1461 + $0x60] sm:$0xff]
    %v1475 = vld [vmem:[%s1461 + $0x68] sm:$0xff]
    %v1476 = vld [vmem:[%s1461 + $0x70] sm:$0xff]
    %v1477 = vld [vmem:[%s1461 + $0x78] sm:$0xff]
    %1478 = vmatprep.subr.mxu0 0.0
    %1479 = vmatpush1.msra.mxu0 %v1477
    %1480 = vmatprep.subr.mxu0 0.0
    %1481 = vmatpush1.msra.mxu0 %v1476
    %1482 = vmatprep.subr.mxu0 0.0
    %1483 = vmatpush1.msra.mxu0 %v1475
    %1484 = vmatprep.subr.mxu0 0.0
    %1485 = vmatpush1.msra.mxu0 %v1474
    %1486 = vmatprep.subr.mxu0 0.0
    %1487 = vmatpush1.msra.mxu0 %v1473
    %1488 = vmatprep.subr.mxu0 0.0
    %1489 = vmatpush1.msra.mxu0 %v1472
    %1490 = vmatprep.subr.mxu0 0.0
    %1491 = vmatpush1.msra.mxu0 %v1471
    %1492 = vmatprep.subr.mxu0 0.0
    %1493 = vmatpush1.msra.mxu0 %v1470
    %1494 = vmatprep.subr.mxu0 0.0
    %1495 = vmatpush1.msra.mxu0 %v1469
    %1496 = vmatprep.subr.mxu0 0.0
    %1497 = vmatpush1.msra.mxu0 %v1468
    %1498 = vmatprep.subr.mxu0 0.0
    %1499 = vmatpush1.msra.mxu0 %v1467
    %1500 = vmatprep.subr.mxu0 0.0
    %1501 = vmatpush1.msra.mxu0 %v1466
    %1502 = vmatprep.subr.mxu0 0.0
    %1503 = vmatpush1.msra.mxu0 %v1465
    %1504 = vmatprep.subr.mxu0 0.0
    %1505 = vmatpush1.msra.mxu0 %v1464
    %1506 = vmatprep.subr.mxu0 0.0
    %1507 = vmatpush1.msra.mxu0 %v1463
    %1508 = vmatprep.subr.mxu0 0.0
    %1509 = vmatpush1.msra.mxu0 %v1462
    %1510 = vmatprep.subr.mxu0 0.0
    %1511 = vmatpush2.msra.mxu0 0.0
    %1512 = vmatprep.subr.mxu0 0.0
    %1513 = vmatpush2.msra.mxu0 0.0
    %1514 = vmatprep.subr.mxu0 0.0
    %1515 = vmatpush2.msra.mxu0 0.0
    %1516 = vmatprep.subr.mxu0 0.0
    %1517 = vmatpush2.msra.mxu0 0.0
    %1518 = vmatprep.subr.mxu0 0.0
    %1519 = vmatpush2.msra.mxu0 0.0
    %1520 = vmatprep.subr.mxu0 0.0
    %1521 = vmatpush2.msra.mxu0 0.0
    %1522 = vmatprep.subr.mxu0 0.0
    %1523 = vmatpush2.msra.mxu0 0.0
    %1524 = vmatprep.subr.mxu0 0.0
    %1525 = vmatpush2.msra.mxu0 0.0
    %1526 = vmatprep.subr.mxu0 0.0
    %1527 = vmatpush2.msra.mxu0 0.0
    %1528 = vmatprep.subr.mxu0 0.0
    %1529 = vmatpush2.msra.mxu0 0.0
    %1530 = vmatprep.subr.mxu0 0.0
    %1531 = vmatpush2.msra.mxu0 0.0
    %1532 = vmatprep.subr.mxu0 0.0
    %1533 = vmatpush2.msra.mxu0 0.0
    %1534 = vmatprep.subr.mxu0 0.0
    %1535 = vmatpush2.msra.mxu0 0.0
    %1536 = vmatprep.subr.mxu0 0.0
    %1537 = vmatpush2.msra.mxu0 0.0
    %1538 = vmatprep.subr.mxu0 0.0
    %1539 = vmatpush2.msra.mxu0 0.0
    %1540 = vmatprep.subr.mxu0 0.0
    %1541 = vmatpush2.msra.mxu0 0.0
    %1542 = vmatprep.mubr.f32.mxu0 0.0
    %1543 = vmatmul.mubr.f32.gmra.mxu0 %v1443
    %v1544 = vpop.f32.mrf.mxu0
    %v1545 = vadd.f32 0.0, %v1544
    %v1546 = vpop.f32.mrf.mxu0
    %1547 = vmatprep.mubr.f32.mxu0 0.0
    %1548 = vmatmul.mubr.f32.gmra.mxu0 %v1448
    %v1549 = vpop.f32.mrf.mxu0
    %v1550 = vadd.f32 0.0, %v1549
    %v1551 = vpop.f32.mrf.mxu0
    %1552 = vmatprep.mubr.f32.mxu0 0.0
    %1553 = vmatmul.mubr.f32.gmra.mxu0 %v1453
    %v1554 = vpop.f32.mrf.mxu0
    %v1555 = vadd.f32 0.0, %v1554
    %v1556 = vpop.f32.mrf.mxu0
    %1557 = vmatprep.mubr.f32.mxu0 0.0
    %1558 = vmatmul.mubr.f32.gmra.mxu0 %v1458
    %v1559 = vpop.f32.mrf.mxu0
    %v1560 = vadd.f32 0.0, %v1559
    %v1561 = vpop.f32.mrf.mxu0
    %1562 = vdwg.mxu0
    %v1563 = vadd.f32 %v1358, %v1545
    %v1564 = vadd.f32 %v1363, %v1550
    %v1565 = vadd.f32 %v1368, %v1555
    %v1566 = vadd.f32 %v1373, %v1560
    %v1567 = vadd.f32 %v1563, %v101
    %v1568 = vadd.f32 %v1564, %v102
    %v1569 = vadd.f32 %v1565, %v103
    %v1570 = vadd.f32 %v1566, %v104
    %1571 = vst [vmem:[#allocation11] sm:$0xff] %v1567
    %1572 = vst [vmem:[#allocation11 + $0x8] sm:$0xff] %v1568
    %1573 = vst [vmem:[#allocation11 + $0x10] sm:$0xff] %v1569
    %1574 = vst [vmem:[#allocation11 + $0x18] sm:$0xff] %v1570
    // Predicated region
    $region58: #{tpu_custom_call.1} parent=1 // pred_check
      _
    $region59: #{tpu_custom_call.1} parent=1 // pred_check_branch
      %1576 = sbr.rel (0) target = $region61
    $region60: #{tpu_custom_call.1} parent=1 // pred_region
      %s1578 = ssub.s32 512, 512
      %1579 = vsyncadd [#allocation4], %s1578
      %s1580 = sshll.u32 [#allocation11], 4
      %s1581 = int_to_ptr.vmem [resolvable:$true] %s1580
      %1586 = dma.vmem_to_hbm [thread:$0]  %s1581, 512, %s9, [#allocation4], 128, 128, 8
    $region61: #{tpu_custom_call.1} parent=1 // pred_fallthru
      _
    // Predicated region
    $region62: #{tpu_custom_call.1} parent=1 // pred_check
      _
    $region63: #{tpu_custom_call.1} parent=1 // pred_check_branch
      %1588 = sbr.rel (0) target = $region65
    $region64: #{tpu_custom_call.1} parent=1 // pred_region
      %1589 = dma.done [#allocation4], 512
    $region65: #{tpu_custom_call.1} parent=1 // pred_fallthru
      _
    %1590 = vsyncpa [#allocation3], 1
    %1591 = vsyncpa [#allocation6], 1
    %1592 = vsyncpa [#allocation9], 1
    %1593 = vsyncpa [#allocation4], 1

</llo_original>
